<compile_context>
chip_gen: v7x
topology: tpu7x:2x2x1
jax: 0.10.0
libtpu: 0.0.40
codegen_flags: <defaults>
</compile_context>

<pallas_src>
import math
import functools

import jax
import jax.numpy as jnp
from jax import lax
from jax.experimental import pallas as pl
from jax.experimental.pallas import tpu as pltpu

# Model constants (from the PyTorch module).
NHEAD = 168            # root / consonant / vowel head width
EMB = 512              # Arcface embedding size
NCLS = 1295            # Arcface class count
ARC_S = 32.0
ARC_M = 0.5
_ARC_COS_M = math.cos(ARC_M)
_ARC_SIN_M = math.sin(ARC_M)
_ARC_MM = math.sin(ARC_M) * ARC_M
_ARC_THRESHOLD = math.cos(math.pi - ARC_M)
_BN_EPS = 1e-5

ARC_TN = 256           # ArcFace class-dim tile (grid axis); Cp is padded to it


# ----------------------------------------------------------------------------
# Fused kernel: backbone stand-in -> heads -> folded BN/Linear -> L2 -> ArcFace
# Grid: (Cp // ARC_TN,) over the ArcFace class dimension.
# ----------------------------------------------------------------------------
def _fused_forward_kernel(
    x_ref,                # (B, D_in)      f32   flattened image (resident)
    lbl_ref,              # (B, 1)         int32 labels (resident, VMEM)
    w_bb_ref, b_bb_ref,   # (D_in, Fp) bf16, (1, Fp) f32   backbone stand-in
    w_he_ref, b_he_ref,   # (Fp, Hp+EMB) bf16, (1, Hp+EMB) f32  heads+emb fused
    w_arc_ref,            # (EMB, TN)      bf16  columns pre-L2-normalized
    heads_ref,            # out (B, Hp)    f32   (resident across grid)
    arc_ref,              # out (B, TN)    f32   (one class tile per step)
    emb_ref,              # scratch (B, EMB) bf16, persists across grid steps
    *, cos_m, sin_m, mm, threshold, s,
):
    f32 = jnp.float32
    bf16 = jnp.bfloat16
    j = pl.program_id(0)
    hp = heads_ref.shape[1]

    # ---- stage 1 (only on the first grid step): backbone -> heads -> emb ---
    @pl.when(j == 0)
    def _stage1():
        # backbone stand-in: Linear + ReLU (bf16 MXU inputs, f32 accumulate)
        feat = jnp.dot(x_ref[...].astype(bf16), w_bb_ref[...],
                       preferred_element_type=f32)
        feat = jnp.maximum(feat + b_bb_ref[...], 0.0)

        # root/consonant/vowel heads + folded BN1->Linear->BN2, one matmul.
        # TODO(synk): train-mode dropout / BN batch statistics not implemented.
        he = jnp.dot(feat.astype(bf16), w_he_ref[...],
                     preferred_element_type=f32) + b_he_ref[...]
        heads_ref[...] = he[:, :hp]

        # F.normalize(x, p=2, dim=1) via rsqrt (EUP slot, VPU-free).
        x_e = he[:, hp:]
        inv_norm = lax.rsqrt(
            jnp.maximum(jnp.sum(x_e * x_e, axis=1, keepdims=True), 1e-24))
        emb_ref[...] = (x_e * inv_norm).astype(bf16)

    # ---- ArcFace(512, 1295) on one class tile; weight cols already L2-norm --
    cos_t = jnp.dot(emb_ref[...], w_arc_ref[...], preferred_element_type=f32)
    cos_t = jnp.clip(cos_t, -1.0, 1.0)
    sin_t = jnp.sqrt(jnp.maximum(1.0 - cos_t * cos_t, 0.0))
    cos_tm = cos_t * cos_m - sin_t * sin_m
    cos_tm = jnp.where(cos_t - threshold <= 0.0, cos_t - mm, cos_tm)

    # Single vector compare for the label one-hot (global column index).
    B, TN = arc_ref.shape
    cols = lax.broadcasted_iota(jnp.int32, (B, TN), 1) + j * TN
    onehot = cols == lbl_ref[...]                 # (B,TN) vs (B,1) broadcast
    arc_ref[...] = jnp.where(onehot, cos_tm, cos_t) * s


# ----------------------------------------------------------------------------
# Parameter preparation (done once, outside the hot path)
# ----------------------------------------------------------------------------
def _round_up(n, m):
    return ((n + m - 1) // m) * m


def _pad_to(x, target, axis):
    pad = target - x.shape[axis]
    if pad <= 0:
        return x
    widths = [(0, 0)] * x.ndim
    widths[axis] = (0, pad)
    return jnp.pad(x, widths)


def prepare_params(params):
    """Fold BNs into the Linear, pre-normalize the ArcFace weight, concatenate
    heads+embedding weights, pad to lane-dense shapes, and cast weights to
    bf16 (biases stay f32)."""
    feat = params["w_bb"].shape[1]
    feat_p = _round_up(feat, 128)          # 32   -> 128
    heads_p = _round_up(3 * NHEAD, 128)    # 504  -> 512
    ncls_p = _round_up(NCLS, ARC_TN)       # 1295 -> 1536

    # BN1 (pre-linear) and BN2 (post-linear), eval mode, folded into Linear.
    a1 = params["bn1_g"] / jnp.sqrt(params["bn1_v"] + _BN_EPS)   # (1, F)
    c1 = params["bn1_b"] - params["bn1_m"] * a1
    a2 = params["bn2_g"] / jnp.sqrt(params["bn2_v"] + _BN_EPS)   # (1, EMB)
    c2 = params["bn2_b"] - params["bn2_m"] * a2
    w_emb = params["w2"] * a1.reshape(-1, 1) * a2.reshape(1, -1)  # (F, EMB)
    b_emb = (c1 @ params["w2"] + params["b2"]) * a2 + c2          # (1, EMB)

    # Heads weight padded to 512 lanes, then fused with the embedding Linear.
    w_heads = _pad_to(params["w_heads"], heads_p, 1)              # (F, 512)
    b_heads = _pad_to(params["b_heads"], heads_p, 1)              # (1, 512)
    w_he = _pad_to(jnp.concatenate([w_heads, w_emb], axis=1), feat_p, 0)
    b_he = jnp.concatenate([b_heads, b_emb], axis=1)              # (1, 1024)

    # ArcFace: l2_norm(weight, axis=0) is constant per forward -> hoist it.
    w_arc = params["w_arc"]
    w_arc_n = w_arc / jnp.sqrt(jnp.sum(w_arc * w_arc, axis=0, keepdims=True))

    return {
        "w_bb": _pad_to(params["w_bb"], feat_p, 1).astype(jnp.bfloat16),
        "b_bb": _pad_to(params["b_bb"], feat_p, 1),
        "w_he": w_he.astype(jnp.bfloat16),
        "b_he": b_he,
        "w_arc": _pad_to(w_arc_n, ncls_p, 1).astype(jnp.bfloat16),
    }


# ----------------------------------------------------------------------------
# Forward wrapper: one pallas_call, slice off the lane padding afterwards
# ----------------------------------------------------------------------------
@jax.jit
def multi_head_forward(x_nchw, unique, prepped):
    B = x_nchw.shape[0]
    x_flat = x_nchw.reshape(B, -1).astype(jnp.float32)   # NCHW flattened row-major
    labels = unique.astype(jnp.int32).reshape(B, 1)

    D_in = x_flat.shape[1]
    Fp = prepped["w_bb"].shape[1]
    HE = prepped["w_he"].shape[1]           # Hp + EMB
    Hp = HE - EMB
    Cp = prepped["w_arc"].shape[1]
    n_tiles = Cp // ARC_TN

    kernel = functools.partial(
        _fused_forward_kernel,
        cos_m=_ARC_COS_M, sin_m=_ARC_SIN_M, mm=_ARC_MM,
        threshold=_ARC_THRESHOLD, s=ARC_S,
    )

    flops = 2 * B * (D_in * Fp + Fp * HE + EMB * Cp)
    transcendentals = B * Cp + B                 # sqrt over cos grid + rsqrt
    bytes_accessed = (
        4 * B * D_in + 4 * B                     # input image + labels
        + 2 * (D_in * Fp + Fp * HE + EMB * Cp)   # bf16 weight streams
        + 4 * (Fp + HE)                          # f32 biases
        + 4 * (B * Hp + B * Cp)                  # outputs
    )

    heads_p, arc_p = pl.pallas_call(
        kernel,
        out_shape=(
            jax.ShapeDtypeStruct((B, Hp), jnp.float32),
            jax.ShapeDtypeStruct((B, Cp), jnp.float32),
        ),
        grid=(n_tiles,),
        in_specs=[
            pl.BlockSpec((B, D_in), lambda j: (0, 0)),      # x (resident)
            pl.BlockSpec((B, 1), lambda j: (0, 0)),         # labels (resident)
            pl.BlockSpec((D_in, Fp), lambda j: (0, 0)),     # w_bb
            pl.BlockSpec((1, Fp), lambda j: (0, 0)),        # b_bb
            pl.BlockSpec((Fp, HE), lambda j: (0, 0)),       # w_he
            pl.BlockSpec((1, HE), lambda j: (0, 0)),        # b_he
            pl.BlockSpec((EMB, ARC_TN), lambda j: (0, j)),  # w_arc (streamed)
        ],
        out_specs=(
            pl.BlockSpec((B, Hp), lambda j: (0, 0)),        # heads (resident)
            pl.BlockSpec((B, ARC_TN), lambda j: (0, j)),    # arc tile
        ),
        scratch_shapes=[pltpu.VMEM((B, EMB), jnp.bfloat16)],
        compiler_params=pltpu.CompilerParams(
            # Later tiles depend on the emb scratch written at step 0.
            dimension_semantics=("arbitrary",)),
        cost_estimate=pl.CostEstimate(
            flops=flops, transcendentals=transcendentals,
            bytes_accessed=bytes_accessed),
    )(x_flat, labels,
      prepped["w_bb"], prepped["b_bb"],
      prepped["w_he"], prepped["b_he"],
      prepped["w_arc"])

    root = heads_p[:, :NHEAD]
    consonant = heads_p[:, NHEAD:2 * NHEAD]
    vowel = heads_p[:, 2 * NHEAD:3 * NHEAD]
    unique_p = arc_p[:, :NCLS]
    return root, consonant, vowel, unique_p


# ----------------------------------------------------------------------------
# Pure-JAX reference (same eval-mode semantics, unprepared f32 params)
# ----------------------------------------------------------------------------
def reference_forward(x_nchw, unique, params):
    B = x_nchw.shape[0]
    xf = x_nchw.reshape(B, -1)
    feat = jnp.maximum(xf @ params["w_bb"] + params["b_bb"], 0.0)
    heads = feat @ params["w_heads"] + params["b_heads"]
    root, consonant, vowel = heads[:, :168], heads[:, 168:336], heads[:, 336:]
    x = (feat - params["bn1_m"]) / jnp.sqrt(params["bn1_v"] + _BN_EPS)
    x = x * params["bn1_g"] + params["bn1_b"]
    x = x @ params["w2"] + params["b2"]
    x = (x - params["bn2_m"]) / jnp.sqrt(params["bn2_v"] + _BN_EPS)
    x = x * params["bn2_g"] + params["bn2_b"]
    x = x / jnp.maximum(jnp.linalg.norm(x, axis=1, keepdims=True), 1e-12)
    w = params["w_arc"]
    kn = w / jnp.linalg.norm(w, axis=0, keepdims=True)
    cos = jnp.clip(x @ kn, -1.0, 1.0)
    sin = jnp.sqrt(jnp.maximum(1.0 - cos * cos, 0.0))
    ctm = cos * _ARC_COS_M - sin * _ARC_SIN_M
    ctm = jnp.where(cos - _ARC_THRESHOLD <= 0.0, cos - _ARC_MM, ctm)
    cols = jnp.arange(w.shape[1])[None, :]
    out = jnp.where(cols == unique[:, None], ctm, cos) * ARC_S
    return root, consonant, vowel, out


# ----------------------------------------------------------------------------
if __name__ == "__main__":
    key = jax.random.PRNGKey(0)
    B, C, H, W = 2, 4, 16, 16           # input image, NCHW
    FEAT = 32                           # stand-in backbone feature size
    D_in = C * H * W

    ks = jax.random.split(key, 20)
    x = jax.random.normal(ks[0], (B, C, H, W), jnp.float32)
    unique = jax.random.randint(ks[1], (B,), 0, NCLS, jnp.int32)

    params = {
        # backbone stand-in
        "w_bb": jax.random.normal(ks[2], (D_in, FEAT), jnp.float32) / math.sqrt(D_in),
        "b_bb": 0.01 * jax.random.normal(ks[3], (1, FEAT), jnp.float32),
        # fused root/consonant/vowel heads: (FEAT, 3*168), PyTorch weight.T
        "w_heads": jax.random.normal(ks[4], (FEAT, 3 * NHEAD), jnp.float32) / math.sqrt(FEAT),
        "b_heads": 0.01 * jax.random.normal(ks[5], (1, 3 * NHEAD), jnp.float32),
        # BatchNorm1d(FEAT)
        "bn1_g": 1.0 + 0.1 * jax.random.normal(ks[6], (1, FEAT), jnp.float32),
        "bn1_b": 0.1 * jax.random.normal(ks[7], (1, FEAT), jnp.float32),
        "bn1_m": 0.1 * jax.random.normal(ks[8], (1, FEAT), jnp.float32),
        "bn1_v": jax.random.uniform(ks[9], (1, FEAT), jnp.float32, 0.5, 1.5),
        # Linear(FEAT, 512)
        "w2": jax.random.normal(ks[10], (FEAT, EMB), jnp.float32) * math.sqrt(2.0 / FEAT),
        "b2": 0.01 * jax.random.normal(ks[11], (1, EMB), jnp.float32),
        # BatchNorm1d(512)
        "bn2_g": 1.0 + 0.1 * jax.random.normal(ks[12], (1, EMB), jnp.float32),
        "bn2_b": 0.1 * jax.random.normal(ks[13], (1, EMB), jnp.float32),
        "bn2_m": 0.1 * jax.random.normal(ks[14], (1, EMB), jnp.float32),
        "bn2_v": jax.random.uniform(ks[15], (1, EMB), jnp.float32, 0.5, 1.5),
        # Arcface weight (embedding_size, classnum)
        "w_arc": jax.random.uniform(ks[16], (EMB, NCLS), jnp.float32, -1.0, 1.0),
    }

    prepped = prepare_params(params)   # one-time: BN fold, arc colnorm, fuse, pad, bf16

    outs = jax.block_until_ready(multi_head_forward(x, unique, prepped))
    root, consonant, vowel, unique_p = outs
    assert root.shape == (B, NHEAD)
    assert consonant.shape == (B, NHEAD)
    assert vowel.shape == (B, NHEAD)
    assert unique_p.shape == (B, NCLS)

    refs = reference_forward(x, unique, params)
    # All weight streams are bf16 on the MXU (f32 accumulate); the ArcFace
    # output is additionally scaled by s=32 -> looser absolute tolerance there.
    tols = [(2e-2, 3e-2), (2e-2, 3e-2), (2e-2, 3e-2), (2e-2, 1e-1)]
    for (got, want), (rtol, atol) in zip(zip(outs, refs), tols):
        assert jnp.allclose(got, want, rtol=rtol, atol=atol), "mismatch vs reference"

    print("KERNEL_OK")
</pallas_src>

<mosaic_0001>
module attributes {stable_mosaic.version = 11 : i64} {
  func.func @_fused_forward_kernel(%arg0: i32, %arg1: memref<2x1024xf32, #tpu.memory_space<vmem>>, %arg2: memref<2x1xi32, #tpu.memory_space<vmem>>, %arg3: memref<1024x128xbf16, #tpu.memory_space<vmem>>, %arg4: memref<1x128xf32, #tpu.memory_space<vmem>>, %arg5: memref<128x1024xbf16, #tpu.memory_space<vmem>>, %arg6: memref<1x1024xf32, #tpu.memory_space<vmem>>, %arg7: memref<512x256xbf16, #tpu.memory_space<vmem>>, %arg8: memref<2x512xf32, #tpu.memory_space<vmem>>, %arg9: memref<2x256xf32, #tpu.memory_space<vmem>>, %arg10: memref<2x512xbf16, #tpu.memory_space<vmem>>) attributes {dimension_semantics = [#tpu.dimension_semantics<arbitrary>], iteration_bounds = array<i64: 6>, scalar_prefetch = 0 : i64, scratch_operands = 1 : i64, tpu.core_type = #tpu.core_type<tc>, window_params = [{pipeline_mode = #tpu.pipeline_mode<synchronous>, transform_indices = @transform_0, window_bounds = array<i64: 2, 1024>}, {pipeline_mode = #tpu.pipeline_mode<synchronous>, transform_indices = @transform_1, window_bounds = array<i64: 2, 1>}, {pipeline_mode = #tpu.pipeline_mode<synchronous>, transform_indices = @transform_2, window_bounds = array<i64: 1024, 128>}, {pipeline_mode = #tpu.pipeline_mode<synchronous>, transform_indices = @transform_3, window_bounds = array<i64: 1, 128>}, {pipeline_mode = #tpu.pipeline_mode<synchronous>, transform_indices = @transform_4, window_bounds = array<i64: 128, 1024>}, {pipeline_mode = #tpu.pipeline_mode<synchronous>, transform_indices = @transform_5, window_bounds = array<i64: 1, 1024>}, {transform_indices = @transform_6, window_bounds = array<i64: 512, 256>}, {pipeline_mode = #tpu.pipeline_mode<synchronous>, transform_indices = @transform_7, window_bounds = array<i64: 2, 512>}, {transform_indices = @transform_8, window_bounds = array<i64: 2, 256>}]} {
    %c0_i32 = arith.constant 0 : i32
    %0 = arith.cmpi eq, %arg0, %c0_i32 : i32
    %1 = arith.extui %0 : i1 to i32
    %c0_i32_0 = arith.constant 0 : i32
    %2 = arith.cmpi ne, %1, %c0_i32_0 : i32
    scf.if %2 {
      %c0_18 = arith.constant 0 : index
      %c0_19 = arith.constant 0 : index
      %39 = vector.load %arg1[%c0_18, %c0_19] : memref<2x1024xf32, #tpu.memory_space<vmem>>, vector<2x1024xf32>
      %40 = arith.truncf %39 : vector<2x1024xf32> to vector<2x1024xbf16>
      %c0_20 = arith.constant 0 : index
      %c0_21 = arith.constant 0 : index
      %41 = vector.load %arg3[%c0_20, %c0_21] : memref<1024x128xbf16, #tpu.memory_space<vmem>>, vector<1024x128xbf16>
      %cst_22 = arith.constant dense<0.000000e+00> : vector<2x128xf32>
      %42 = tpu.matmul %40, %41, %cst_22 {dimension_numbers = #tpu.dot_dimension_numbers<[1], [0], [0], [1], [0, 0, 1, 1], [], []>} : vector<2x1024xbf16>, vector<1024x128xbf16>, vector<2x128xf32> -> vector<2x128xf32>
      %c0_23 = arith.constant 0 : index
      %c0_24 = arith.constant 0 : index
      %43 = vector.load %arg4[%c0_23, %c0_24] : memref<1x128xf32, #tpu.memory_space<vmem>>, vector<1x128xf32>
      %44 = vector.broadcast %43 : vector<1x128xf32> to vector<2x128xf32>
      %45 = arith.addf %42, %44 : vector<2x128xf32>
      %cst_25 = arith.constant 0.000000e+00 : f32
      %46 = vector.broadcast %cst_25 : f32 to vector<2x128xf32>
      %47 = arith.maximumf %45, %46 : vector<2x128xf32>
      %48 = arith.truncf %47 : vector<2x128xf32> to vector<2x128xbf16>
      %c0_26 = arith.constant 0 : index
      %c0_27 = arith.constant 0 : index
      %49 = vector.load %arg5[%c0_26, %c0_27] : memref<128x1024xbf16, #tpu.memory_space<vmem>>, vector<128x1024xbf16>
      %cst_28 = arith.constant dense<0.000000e+00> : vector<2x1024xf32>
      %50 = tpu.matmul %48, %49, %cst_28 {dimension_numbers = #tpu.dot_dimension_numbers<[1], [0], [0], [1], [0, 0, 1, 1], [], []>} : vector<2x128xbf16>, vector<128x1024xbf16>, vector<2x1024xf32> -> vector<2x1024xf32>
      %c0_29 = arith.constant 0 : index
      %c0_30 = arith.constant 0 : index
      %51 = vector.load %arg6[%c0_29, %c0_30] : memref<1x1024xf32, #tpu.memory_space<vmem>>, vector<1x1024xf32>
      %52 = vector.broadcast %51 : vector<1x1024xf32> to vector<2x1024xf32>
      %53 = arith.addf %50, %52 : vector<2x1024xf32>
      %54 = vector.extract_strided_slice %53 {offsets = [0, 0], sizes = [2, 512], strides = [1, 1]} : vector<2x1024xf32> to vector<2x512xf32>
      %c0_31 = arith.constant 0 : index
      %c0_32 = arith.constant 0 : index
      %55 = vector.load %arg8[%c0_31, %c0_32] : memref<2x512xf32, #tpu.memory_space<vmem>>, vector<2x512xf32>
      tpu.vector_store %arg8[%c0_31, %c0_32], %54 {strides = array<i32>} : memref<2x512xf32, #tpu.memory_space<vmem>>, vector<2x512xf32>,
      %56 = vector.extract_strided_slice %53 {offsets = [0, 512], sizes = [2, 512], strides = [1, 1]} : vector<2x1024xf32> to vector<2x512xf32>
      %57 = arith.mulf %56, %56 : vector<2x512xf32>
      %cst_33 = arith.constant dense<0.000000e+00> : vector<2xf32>
      %58 = vector.multi_reduction <add>, %57, %cst_33 [1] : vector<2x512xf32> to vector<2xf32>
      %59 = vector.shape_cast %58 : vector<2xf32> to vector<2x1xf32>
      %cst_34 = arith.constant 1.000000e-24 : f32
      %60 = vector.broadcast %cst_34 : f32 to vector<2x1xf32>
      %61 = arith.maximumf %59, %60 : vector<2x1xf32>
      %62 = math.rsqrt %61 : vector<2x1xf32>
      %63 = vector.broadcast %62 : vector<2x1xf32> to vector<2x512xf32>
      %64 = arith.mulf %56, %63 : vector<2x512xf32>
      %65 = arith.truncf %64 : vector<2x512xf32> to vector<2x512xbf16>
      %c0_35 = arith.constant 0 : index
      %c0_36 = arith.constant 0 : index
      %66 = vector.load %arg10[%c0_35, %c0_36] : memref<2x512xbf16, #tpu.memory_space<vmem>>, vector<2x512xbf16>
      tpu.vector_store %arg10[%c0_35, %c0_36], %65 {strides = array<i32>} : memref<2x512xbf16, #tpu.memory_space<vmem>>, vector<2x512xbf16>,
    } else {
    }
    %c0 = arith.constant 0 : index
    %c0_1 = arith.constant 0 : index
    %3 = vector.load %arg10[%c0, %c0_1] : memref<2x512xbf16, #tpu.memory_space<vmem>>, vector<2x512xbf16>
    %c0_2 = arith.constant 0 : index
    %c0_3 = arith.constant 0 : index
    %4 = vector.load %arg7[%c0_2, %c0_3] : memref<512x256xbf16, #tpu.memory_space<vmem>>, vector<512x256xbf16>
    %cst = arith.constant dense<0.000000e+00> : vector<2x256xf32>
    %5 = tpu.matmul %3, %4, %cst {dimension_numbers = #tpu.dot_dimension_numbers<[1], [0], [0], [1], [0, 0, 1, 1], [], []>} : vector<2x512xbf16>, vector<512x256xbf16>, vector<2x256xf32> -> vector<2x256xf32>
    %cst_4 = arith.constant -1.000000e+00 : f32
    %cst_5 = arith.constant 1.000000e+00 : f32
    %6 = vector.broadcast %cst_4 : f32 to vector<2x256xf32>
    %7 = arith.maximumf %6, %5 : vector<2x256xf32>
    %8 = vector.broadcast %cst_5 : f32 to vector<2x256xf32>
    %9 = arith.minimumf %8, %7 : vector<2x256xf32>
    %10 = arith.mulf %9, %9 : vector<2x256xf32>
    %cst_6 = arith.constant 1.000000e+00 : f32
    %11 = vector.broadcast %cst_6 : f32 to vector<2x256xf32>
    %12 = arith.subf %11, %10 : vector<2x256xf32>
    %cst_7 = arith.constant 0.000000e+00 : f32
    %13 = vector.broadcast %cst_7 : f32 to vector<2x256xf32>
    %14 = arith.maximumf %12, %13 : vector<2x256xf32>
    %15 = math.sqrt %14 : vector<2x256xf32>
    %cst_8 = arith.constant 0.87758255 : f32
    %16 = vector.broadcast %cst_8 : f32 to vector<2x256xf32>
    %17 = arith.mulf %9, %16 : vector<2x256xf32>
    %cst_9 = arith.constant 0.47942555 : f32
    %18 = vector.broadcast %cst_9 : f32 to vector<2x256xf32>
    %19 = arith.mulf %15, %18 : vector<2x256xf32>
    %20 = arith.subf %17, %19 : vector<2x256xf32>
    %cst_10 = arith.constant -0.87758255 : f32
    %21 = vector.broadcast %cst_10 : f32 to vector<2x256xf32>
    %22 = arith.subf %9, %21 : vector<2x256xf32>
    %cst_11 = arith.constant 0.000000e+00 : f32
    %23 = vector.broadcast %cst_11 : f32 to vector<2x256xf32>
    %24 = arith.cmpf ole, %22, %23 : vector<2x256xf32>
    %cst_12 = arith.constant 0.239712775 : f32
    %25 = vector.broadcast %cst_12 : f32 to vector<2x256xf32>
    %26 = arith.subf %9, %25 : vector<2x256xf32>
    %27 = arith.select %24, %26, %20 : vector<2x256xi1>, vector<2x256xf32>
    %28 = tpu.iota {dimensions = array<i32: 1>} : vector<2x256xi32>
    %c256_i32 = arith.constant 256 : i32
    %29 = arith.muli %arg0, %c256_i32 : i32
    %30 = vector.broadcast %29 : i32 to vector<2x256xi32>
    %31 = arith.addi %28, %30 : vector<2x256xi32>
    %c0_13 = arith.constant 0 : index
    %c0_14 = arith.constant 0 : index
    %32 = vector.load %arg2[%c0_13, %c0_14] : memref<2x1xi32, #tpu.memory_space<vmem>>, vector<2x1xi32>
    %33 = vector.broadcast %32 : vector<2x1xi32> to vector<2x256xi32>
    %34 = arith.cmpi eq, %31, %33 : vector<2x256xi32>
    %35 = arith.select %34, %27, %9 : vector<2x256xi1>, vector<2x256xf32>
    %cst_15 = arith.constant 3.200000e+01 : f32
    %36 = vector.broadcast %cst_15 : f32 to vector<2x256xf32>
    %37 = arith.mulf %35, %36 : vector<2x256xf32>
    %c0_16 = arith.constant 0 : index
    %c0_17 = arith.constant 0 : index
    %38 = vector.load %arg9[%c0_16, %c0_17] : memref<2x256xf32, #tpu.memory_space<vmem>>, vector<2x256xf32>
    tpu.vector_store %arg9[%c0_16, %c0_17], %37 {strides = array<i32>} : memref<2x256xf32, #tpu.memory_space<vmem>>, vector<2x256xf32>,
    return
  }
  func.func @transform_0(%arg0: i32) -> (i32, i32) {
    %c0_i32 = arith.constant 0 : i32
    %c0_i32_0 = arith.constant 0 : i32
    %c0_i32_1 = arith.constant 0 : i32
    return %c0_i32, %c0_i32_0 : i32, i32
  }
  func.func @transform_1(%arg0: i32) -> (i32, i32) {
    %c0_i32 = arith.constant 0 : i32
    %c0_i32_0 = arith.constant 0 : i32
    %c0_i32_1 = arith.constant 0 : i32
    return %c0_i32, %c0_i32_0 : i32, i32
  }
  func.func @transform_2(%arg0: i32) -> (i32, i32) {
    %c0_i32 = arith.constant 0 : i32
    %c0_i32_0 = arith.constant 0 : i32
    %c0_i32_1 = arith.constant 0 : i32
    return %c0_i32, %c0_i32_0 : i32, i32
  }
  func.func @transform_3(%arg0: i32) -> (i32, i32) {
    %c0_i32 = arith.constant 0 : i32
    %c0_i32_0 = arith.constant 0 : i32
    %c0_i32_1 = arith.constant 0 : i32
    return %c0_i32, %c0_i32_0 : i32, i32
  }
  func.func @transform_4(%arg0: i32) -> (i32, i32) {
    %c0_i32 = arith.constant 0 : i32
    %c0_i32_0 = arith.constant 0 : i32
    %c0_i32_1 = arith.constant 0 : i32
    return %c0_i32, %c0_i32_0 : i32, i32
  }
  func.func @transform_5(%arg0: i32) -> (i32, i32) {
    %c0_i32 = arith.constant 0 : i32
    %c0_i32_0 = arith.constant 0 : i32
    %c0_i32_1 = arith.constant 0 : i32
    return %c0_i32, %c0_i32_0 : i32, i32
  }
  func.func @transform_6(%arg0: i32) -> (i32, i32) {
    %c0_i32 = arith.constant 0 : i32
    %c0_i32_0 = arith.constant 0 : i32
    return %c0_i32, %arg0 : i32, i32
  }
  func.func @transform_7(%arg0: i32) -> (i32, i32) {
    %c0_i32 = arith.constant 0 : i32
    %c0_i32_0 = arith.constant 0 : i32
    %c0_i32_1 = arith.constant 0 : i32
    return %c0_i32, %c0_i32_0 : i32, i32
  }
  func.func @transform_8(%arg0: i32) -> (i32, i32) {
    %c0_i32 = arith.constant 0 : i32
    %c0_i32_0 = arith.constant 0 : i32
    return %c0_i32, %arg0 : i32, i32
  }
}

</mosaic_0001>

<llo_original>
// kernel: multi_head_forward.1
$region0: #{multi_head_forward.1}
  #allocation0 [shape = 'u32[]', space=smem, size = 0x4, offset = 0x4, fixed_abs, tag = 'smem constant byte address 0x4 - core index']
  #allocation1 [shape = 'u32[144,128]{1,0:T(1,128)}', space=vmem, size = 0x12000, scoped, tag = 'internal scratch']
  #allocation2 [shape = 'bf16[2,512]{1,0:T(2,128)(2,1)}', space=vmem, size = 0x800, scoped, tag = 'scratch operand']
  %s0 = inlined_call_operand.vmem [shape: f32[2,1024], index: 0, kind: input, shape index: {}]
  %s1 = inlined_call_operand.vmem [shape: s32[2,1], index: 1, kind: input, shape index: {}]
  %s2 = inlined_call_operand.hbm [shape: bf16[1024,128], index: 2, kind: input, shape index: {}]
  %s3 = inlined_call_operand.hbm [shape: f32[1,128], index: 3, kind: input, shape index: {}]
  %s4 = inlined_call_operand.hbm [shape: bf16[128,1024], index: 4, kind: input, shape index: {}]
  %s5 = inlined_call_operand.hbm [shape: f32[1,1024], index: 5, kind: input, shape index: {}]
  %s6 = inlined_call_operand.hbm [shape: bf16[512,1536], index: 6, kind: input, shape index: {}]
  %s7 = inlined_call_operand.vmem [shape: f32[2,512], index: 7, kind: output, shape index: {0}]
  %s8 = inlined_call_operand.vmem [shape: f32[2,1536], index: 8, kind: output, shape index: {1}]
  %9 = xla_tuple %s7, %s8
  %s10 = sld [smem:[#allocation0]]
  $region93: #{multi_head_forward.1} parent=0
    _
  %s12 = ssub.s32 1, %s10
  %s13 = scalar_select 0, %s12, %s10
  $region1: #{multi_head_forward.1} parent=0
    #allocation3 [shape = 'u8[262144]{0}', space=vmem, size = 0x40000, scoped, tag = 'input window, operand 2, single buffered']
    #allocation4 [shape = 's32[2]{0}', space=sflag, size = 0x8, scoped, tag = 'scoped memory for multi_head_forward.1']
    #allocation5 [shape = 'u8[512]{0}', space=vmem, size = 0x400, scoped, tag = 'input window, operand 3, single buffered']
    #allocation6 [shape = 's32[1]{0}', space=sflag, size = 0x4, scoped, tag = 'scoped memory for multi_head_forward.1']
    #allocation7 [shape = 'u8[262144]{0}', space=vmem, size = 0x40000, scoped, tag = 'input window, operand 4, single buffered']
    #allocation8 [shape = 'u8[4096]{0}', space=vmem, size = 0x1000, scoped, tag = 'input window, operand 5, single buffered']
    #allocation9 [shape = 's32[1]{0}', space=sflag, size = 0x4, scoped, tag = 'scoped memory for multi_head_forward.1']
    #allocation10 [shape = 'u8[524288]{0}', space=vmem, size = 0x80000, scoped, tag = 'input window, operand 6']
    %14 = vsyncpa [#allocation4], 0
    %15 = vsyncpa [#allocation6], 0
    %16 = vsyncpa [#allocation9], 0
    loop: start=0, step=1, limit=8
    $region2: #{multi_head_forward.1} parent=1 // loop_pre_header
      _
    $region3: #{multi_head_forward.1} parent=1 // loop_header
      %s18 = sphi 0, %s22
      %p19 = scmp.ge.s32.totalorder %s18, 8
      %s26 = sphi 0, %s26
      %s28 = sphi 0, %s26
      %s29 = sphi 0, %s28
      %s43 = sphi 0, %s29
      %s47 = sphi 0, %s47
      %s49 = sphi 0, %s47
      %s50 = sphi 0, %s49
      %s64 = sphi 0, %s50
      %s68 = sphi 0, %s68
      %s70 = sphi 0, %s68
      %s71 = sphi 0, %s70
      %s85 = sphi 0, %s71
      %s89 = sphi 0, %s89
      %s91 = sphi 0, %s89
      %s92 = sphi 0, %s91
      %s106 = sphi 0, %s92
      %s110 = sphi 0, %s110
      %s112 = sphi 0, %s110
      %s113 = sphi 0, %s112
      %s127 = sphi 0, %s113
      %s131 = sphi 0, %s131
      %s133 = sphi 0, %s131
      %s134 = sphi 0, %s133
      %s148 = sphi 0, %s134
      %s154 = sphi 0, %s156
      %s157 = sphi 0, %s154
      %s158 = sphi 0, %s157
      %s174 = sphi 0, %s158
      %s178 = sphi 0, %s178
      %s180 = sphi 0, %s178
      %s181 = sphi 0, %s180
      %s195 = sphi 0, %s181
      %s201 = sphi 0, %s203
      %s204 = sphi 0, %s201
      %s205 = sphi 0, %s204
      %s221 = sphi 0, %s205
    $region4: #{multi_head_forward.1} parent=1 // loop_header_branch
      %21 = sbr.rel (%p19) target = $region8
    $region5: #{multi_head_forward.1} parent=1 // loop_body
      %s23 = ssub.s32 %s18, 1
      %s24 = ssub.s32 %s18, 2
      %s25 = sadd.s32 %s18, 1
      %s27 = sadd.s32 %s26, 1
      %p30 = scmp.eq.s32.totalorder %s18, 5
      %p31 = scmp.ne.s32.totalorder %s26, %s28
      %p32 = scmp.eq.s32.totalorder %s18, 0
      %p33 = por %p31, %p32
      %p34 = scmp.ne.s32.totalorder %s26, %s28
      %p35 = scmp.eq.s32.totalorder %s23, 5
      %p36 = por %p34, %p35
      %p37 = scmp.ne.s32.totalorder %s28, %s29
      %p38 = scmp.eq.s32.totalorder %s23, 0
      %p39 = por %p37, %p38
      %p40 = scmp.ne.s32.totalorder %s28, %s29
      %p41 = scmp.eq.s32.totalorder %s24, 5
      %p42 = por %p40, %p41
      %p44 = scmp.ne.s32.totalorder %s29, %s43
      %p45 = scmp.eq.s32.totalorder %s24, 0
      %p46 = por %p44, %p45
      %s48 = sadd.s32 %s47, 1
      %p51 = scmp.eq.s32.totalorder %s18, 5
      %p52 = scmp.ne.s32.totalorder %s47, %s49
      %p53 = scmp.eq.s32.totalorder %s18, 0
      %p54 = por %p52, %p53
      %p55 = scmp.ne.s32.totalorder %s47, %s49
      %p56 = scmp.eq.s32.totalorder %s23, 5
      %p57 = por %p55, %p56
      %p58 = scmp.ne.s32.totalorder %s49, %s50
      %p59 = scmp.eq.s32.totalorder %s23, 0
      %p60 = por %p58, %p59
      %p61 = scmp.ne.s32.totalorder %s49, %s50
      %p62 = scmp.eq.s32.totalorder %s24, 5
      %p63 = por %p61, %p62
      %p65 = scmp.ne.s32.totalorder %s50, %s64
      %p66 = scmp.eq.s32.totalorder %s24, 0
      %p67 = por %p65, %p66
      %s69 = sadd.s32 %s68, 1
      %p72 = scmp.eq.s32.totalorder %s18, 5
      %p73 = scmp.ne.s32.totalorder %s68, %s70
      %p74 = scmp.eq.s32.totalorder %s18, 0
      %p75 = por %p73, %p74
      %p76 = scmp.ne.s32.totalorder %s68, %s70
      %p77 = scmp.eq.s32.totalorder %s23, 5
      %p78 = por %p76, %p77
      %p79 = scmp.ne.s32.totalorder %s70, %s71
      %p80 = scmp.eq.s32.totalorder %s23, 0
      %p81 = por %p79, %p80
      %p82 = scmp.ne.s32.totalorder %s70, %s71
      %p83 = scmp.eq.s32.totalorder %s24, 5
      %p84 = por %p82, %p83
      %p86 = scmp.ne.s32.totalorder %s71, %s85
      %p87 = scmp.eq.s32.totalorder %s24, 0
      %p88 = por %p86, %p87
      %s90 = sadd.s32 %s89, 1
      %p93 = scmp.eq.s32.totalorder %s18, 5
      %p94 = scmp.ne.s32.totalorder %s89, %s91
      %p95 = scmp.eq.s32.totalorder %s18, 0
      %p96 = por %p94, %p95
      %p97 = scmp.ne.s32.totalorder %s89, %s91
      %p98 = scmp.eq.s32.totalorder %s23, 5
      %p99 = por %p97, %p98
      %p100 = scmp.ne.s32.totalorder %s91, %s92
      %p101 = scmp.eq.s32.totalorder %s23, 0
      %p102 = por %p100, %p101
      %p103 = scmp.ne.s32.totalorder %s91, %s92
      %p104 = scmp.eq.s32.totalorder %s24, 5
      %p105 = por %p103, %p104
      %p107 = scmp.ne.s32.totalorder %s92, %s106
      %p108 = scmp.eq.s32.totalorder %s24, 0
      %p109 = por %p107, %p108
      %s111 = sadd.s32 %s110, 1
      %p114 = scmp.eq.s32.totalorder %s18, 5
      %p115 = scmp.ne.s32.totalorder %s110, %s112
      %p116 = scmp.eq.s32.totalorder %s18, 0
      %p117 = por %p115, %p116
      %p118 = scmp.ne.s32.totalorder %s110, %s112
      %p119 = scmp.eq.s32.totalorder %s23, 5
      %p120 = por %p118, %p119
      %p121 = scmp.ne.s32.totalorder %s112, %s113
      %p122 = scmp.eq.s32.totalorder %s23, 0
      %p123 = por %p121, %p122
      %p124 = scmp.ne.s32.totalorder %s112, %s113
      %p125 = scmp.eq.s32.totalorder %s24, 5
      %p126 = por %p124, %p125
      %p128 = scmp.ne.s32.totalorder %s113, %s127
      %p129 = scmp.eq.s32.totalorder %s24, 0
      %p130 = por %p128, %p129
      %s132 = sadd.s32 %s131, 1
      %p135 = scmp.eq.s32.totalorder %s18, 5
      %p136 = scmp.ne.s32.totalorder %s131, %s133
      %p137 = scmp.eq.s32.totalorder %s18, 0
      %p138 = por %p136, %p137
      %p139 = scmp.ne.s32.totalorder %s131, %s133
      %p140 = scmp.eq.s32.totalorder %s23, 5
      %p141 = por %p139, %p140
      %p142 = scmp.ne.s32.totalorder %s133, %s134
      %p143 = scmp.eq.s32.totalorder %s23, 0
      %p144 = por %p142, %p143
      %p145 = scmp.ne.s32.totalorder %s133, %s134
      %p146 = scmp.eq.s32.totalorder %s24, 5
      %p147 = por %p145, %p146
      %p149 = scmp.ne.s32.totalorder %s134, %s148
      %p150 = scmp.eq.s32.totalorder %s24, 0
      %p151 = por %p149, %p150
      %s152 = ssub.s32 %s18, %s25
      %p153 = scmp.eq.s32.totalorder %s152, 0
      %s155 = sadd.s32 %s154, 1
      %s156 = scalar_select %p153, %s154, %s155
      %p159 = pneg %p153
      %p160 = scmp.eq.s32.totalorder %s18, 5
      %p161 = por %p159, %p160
      %p162 = scmp.ne.s32.totalorder %s154, %s157
      %p163 = scmp.eq.s32.totalorder %s18, 0
      %p164 = por %p162, %p163
      %p165 = scmp.ne.s32.totalorder %s154, %s157
      %p166 = scmp.eq.s32.totalorder %s23, 5
      %p167 = por %p165, %p166
      %p168 = scmp.ne.s32.totalorder %s157, %s158
      %p169 = scmp.eq.s32.totalorder %s23, 0
      %p170 = por %p168, %p169
      %p171 = scmp.ne.s32.totalorder %s157, %s158
      %p172 = scmp.eq.s32.totalorder %s24, 5
      %p173 = por %p171, %p172
      %p175 = scmp.ne.s32.totalorder %s158, %s174
      %p176 = scmp.eq.s32.totalorder %s24, 0
      %p177 = por %p175, %p176
      %s179 = sadd.s32 %s178, 1
      %p182 = scmp.eq.s32.totalorder %s18, 5
      %p183 = scmp.ne.s32.totalorder %s178, %s180
      %p184 = scmp.eq.s32.totalorder %s18, 0
      %p185 = por %p183, %p184
      %p186 = scmp.ne.s32.totalorder %s178, %s180
      %p187 = scmp.eq.s32.totalorder %s23, 5
      %p188 = por %p186, %p187
      %p189 = scmp.ne.s32.totalorder %s180, %s181
      %p190 = scmp.eq.s32.totalorder %s23, 0
      %p191 = por %p189, %p190
      %p192 = scmp.ne.s32.totalorder %s180, %s181
      %p193 = scmp.eq.s32.totalorder %s24, 5
      %p194 = por %p192, %p193
      %p196 = scmp.ne.s32.totalorder %s181, %s195
      %p197 = scmp.eq.s32.totalorder %s24, 0
      %p198 = por %p196, %p197
      %s199 = ssub.s32 %s18, %s25
      %p200 = scmp.eq.s32.totalorder %s199, 0
      %s202 = sadd.s32 %s201, 1
      %s203 = scalar_select %p200, %s201, %s202
      %p206 = pneg %p200
      %p207 = scmp.eq.s32.totalorder %s18, 5
      %p208 = por %p206, %p207
      %p209 = scmp.ne.s32.totalorder %s201, %s204
      %p210 = scmp.eq.s32.totalorder %s18, 0
      %p211 = por %p209, %p210
      %p212 = scmp.ne.s32.totalorder %s201, %s204
      %p213 = scmp.eq.s32.totalorder %s23, 5
      %p214 = por %p212, %p213
      %p215 = scmp.ne.s32.totalorder %s204, %s205
      %p216 = scmp.eq.s32.totalorder %s23, 0
      %p217 = por %p215, %p216
      %p218 = scmp.ne.s32.totalorder %s204, %s205
      %p219 = scmp.eq.s32.totalorder %s24, 5
      %p220 = por %p218, %p219
      %p222 = scmp.ne.s32.totalorder %s205, %s221
      %p223 = scmp.eq.s32.totalorder %s24, 0
      %p224 = por %p222, %p223
      %p225 = scmp.le.s32.totalorder 1, %s18
      %p226 = scmp.lt.s32.totalorder %s18, 7
      %p227 = pnand %p225, %p226
      %p228 = pneg %p227
      // Predicated region
      $region9: #{multi_head_forward.1} parent=5 // pred_check
        _
      $region10: #{multi_head_forward.1} parent=5 // pred_check_branch
        %230 = sbr.rel (%p227) target = $region12
      $region11: #{multi_head_forward.1} parent=5 // pred_region
        %s231 = ssub.s32 %s18, 1
        // Predicated region
        $region13: #{multi_head_forward.1} parent=11 // pred_check
          %p232 = pneg %p39
        $region14: #{multi_head_forward.1} parent=11 // pred_check_branch
          %234 = sbr.rel (%p232) target = $region16
        $region15: #{multi_head_forward.1} parent=11 // pred_region
          _
        $region16: #{multi_head_forward.1} parent=11 // pred_fallthru
          _
        // Predicated region
        $region17: #{multi_head_forward.1} parent=11 // pred_check
          %p235 = pneg %p60
        $region18: #{multi_head_forward.1} parent=11 // pred_check_branch
          %237 = sbr.rel (%p235) target = $region20
        $region19: #{multi_head_forward.1} parent=11 // pred_region
          _
        $region20: #{multi_head_forward.1} parent=11 // pred_fallthru
          _
        // Predicated region
        $region21: #{multi_head_forward.1} parent=11 // pred_check
          %p238 = pneg %p81
        $region22: #{multi_head_forward.1} parent=11 // pred_check_branch
          %240 = sbr.rel (%p238) target = $region24
        $region23: #{multi_head_forward.1} parent=11 // pred_region
          %s242 = ssub.s32 8192, 8192
          %243 = vsyncadd [#allocation4], %s242
          %s244 = sshll.u32 [#allocation3], 4
          %s245 = int_to_ptr.vmem [resolvable:$true] %s244
          %250 = dma.hbm_to_vmem [thread:$0]  %s2, 8192, %s245, [#allocation4], 64, 64, 4
        $region24: #{multi_head_forward.1} parent=11 // pred_fallthru
          _
        // Predicated region
        $region25: #{multi_head_forward.1} parent=11 // pred_check
          %p251 = pneg %p102
        $region26: #{multi_head_forward.1} parent=11 // pred_check_branch
          %253 = sbr.rel (%p251) target = $region28
        $region27: #{multi_head_forward.1} parent=11 // pred_region
          %s255 = ssub.s32 16, 16
          %256 = vsyncadd [#allocation6], %s255
          %s258 = sshll.u32 [#allocation5], 4
          %s259 = int_to_ptr.vmem [resolvable:$true] %s258
          %261 = dma.hbm_to_vmem [thread:$0]  %s3, 16, %s259, [#allocation6]
        $region28: #{multi_head_forward.1} parent=11 // pred_fallthru
          _
        // Predicated region
        $region29: #{multi_head_forward.1} parent=11 // pred_check
          %p262 = pneg %p123
        $region30: #{multi_head_forward.1} parent=11 // pred_check_branch
          %264 = sbr.rel (%p262) target = $region32
        $region31: #{multi_head_forward.1} parent=11 // pred_region
          %s266 = ssub.s32 8192, 8192
          %267 = vsyncadd [#allocation6], %s266
          %s268 = sshll.u32 [#allocation7], 4
          %s269 = int_to_ptr.vmem [resolvable:$true] %s268
          %274 = dma.hbm_to_vmem [thread:$0]  %s4, 8192, %s269, [#allocation6], 512, 512, 32
        $region32: #{multi_head_forward.1} parent=11 // pred_fallthru
          _
        // Predicated region
        $region33: #{multi_head_forward.1} parent=11 // pred_check
          %p275 = pneg %p144
        $region34: #{multi_head_forward.1} parent=11 // pred_check_branch
          %277 = sbr.rel (%p275) target = $region36
        $region35: #{multi_head_forward.1} parent=11 // pred_region
          %s279 = ssub.s32 128, 128
          %280 = vsyncadd [#allocation9], %s279
          %s282 = sshll.u32 [#allocation8], 4
          %s283 = int_to_ptr.vmem [resolvable:$true] %s282
          %285 = dma.hbm_to_vmem [thread:$0]  %s5, 128, %s283, [#allocation9]
        $region36: #{multi_head_forward.1} parent=11 // pred_fallthru
          _
      $region12: #{multi_head_forward.1} parent=5 // pred_fallthru
        _
      %p286 = scmp.lt.s32.totalorder %s18, 6
      // Predicated region
      $region37: #{multi_head_forward.1} parent=5 // pred_check
        %p287 = pneg %p286
      $region38: #{multi_head_forward.1} parent=5 // pred_check_branch
        %289 = sbr.rel (%p287) target = $region40
      $region39: #{multi_head_forward.1} parent=5 // pred_region
        // Predicated region
        $region41: #{multi_head_forward.1} parent=39 // pred_check
          %p290 = pneg %p164
        $region42: #{multi_head_forward.1} parent=39 // pred_check_branch
          %292 = sbr.rel (%p290) target = $region44
        $region43: #{multi_head_forward.1} parent=39 // pred_region
          %s293 = sand.u32 %s18, 1
          %s294 = scalar_lea.sflag [#allocation4], %s293
          %s295 = sand.u32 %s154, 1
          %s296 = smul.addr %s295, 512
          %s297 = scalar_lea.vmem [#allocation10], %s296
          %s298 = smul.u32 2, %s18
          %s300 = ssub.s32 8192, 8192
          %301 = vsyncadd %s294, %s300
          %s302 = smul.addr %s298, 64
          %s303 = scalar_lea.hbm %s6, %s302
          %s304 = sshll.u32 %s297, 4
          %s305 = int_to_ptr.vmem [resolvable:$true] %s304
          %310 = dma.hbm_to_vmem [thread:$0]  %s303, 8192, %s305, %s294, 768, 128, 8
        $region44: #{multi_head_forward.1} parent=39 // pred_fallthru
          _
      $region40: #{multi_head_forward.1} parent=5 // pred_fallthru
        _
      %p311 = scmp.le.s32.totalorder 1, %s18
      %p312 = scmp.lt.s32.totalorder %s18, 7
      %p313 = pnand %p311, %p312
      %p314 = pneg %p313
      // Predicated region
      $region45: #{multi_head_forward.1} parent=5 // pred_check
        _
      $region46: #{multi_head_forward.1} parent=5 // pred_check_branch
        %316 = sbr.rel (%p313) target = $region48
      $region47: #{multi_head_forward.1} parent=5 // pred_region
        %s317 = ssub.s32 %s18, 1
        // Predicated region
        $region49: #{multi_head_forward.1} parent=47 // pred_check
          %p318 = pneg %p81
        $region50: #{multi_head_forward.1} parent=47 // pred_check_branch
          %320 = sbr.rel (%p318) target = $region52
        $region51: #{multi_head_forward.1} parent=47 // pred_region
          %321 = dma.done [#allocation4], 8192
        $region52: #{multi_head_forward.1} parent=47 // pred_fallthru
          _
        // Predicated region
        $region53: #{multi_head_forward.1} parent=47 // pred_check
          %p322 = pneg %p102
        $region54: #{multi_head_forward.1} parent=47 // pred_check_branch
          %324 = sbr.rel (%p322) target = $region56
        $region55: #{multi_head_forward.1} parent=47 // pred_region
          %325 = dma.done [#allocation6], 16
        $region56: #{multi_head_forward.1} parent=47 // pred_fallthru
          _
        // Predicated region
        $region57: #{multi_head_forward.1} parent=47 // pred_check
          %p326 = pneg %p123
        $region58: #{multi_head_forward.1} parent=47 // pred_check_branch
          %328 = sbr.rel (%p326) target = $region60
        $region59: #{multi_head_forward.1} parent=47 // pred_region
          %329 = dma.done [#allocation6], 8192
        $region60: #{multi_head_forward.1} parent=47 // pred_fallthru
          _
        // Predicated region
        $region61: #{multi_head_forward.1} parent=47 // pred_check
          %p330 = pneg %p144
        $region62: #{multi_head_forward.1} parent=47 // pred_check_branch
          %332 = sbr.rel (%p330) target = $region64
        $region63: #{multi_head_forward.1} parent=47 // pred_region
          %333 = dma.done [#allocation9], 128
        $region64: #{multi_head_forward.1} parent=47 // pred_fallthru
          _
        %s334 = sand.u32 %s23, 1
        %s335 = scalar_lea.sflag [#allocation4], %s334
        %s336 = sand.u32 %s157, 1
        %s337 = smul.addr %s336, 512
        %s338 = scalar_lea.vmem [#allocation10], %s337
        // Predicated region
        $region65: #{multi_head_forward.1} parent=47 // pred_check
          %p339 = pneg %p170
        $region66: #{multi_head_forward.1} parent=47 // pred_check_branch
          %341 = sbr.rel (%p339) target = $region68
        $region67: #{multi_head_forward.1} parent=47 // pred_region
          %342 = dma.done %s335, 8192
        $region68: #{multi_head_forward.1} parent=47 // pred_fallthru
          _
        %p343 = pneg %p39
        %p344 = pneg %p36
        %p345 = pneg %p60
        %p346 = pneg %p57
        %p347 = pneg %p81
        %p348 = pneg %p78
        %p349 = pneg %p102
        %p350 = pneg %p99
        %p351 = pneg %p123
        %p352 = pneg %p120
        %p353 = pneg %p144
        %p354 = pneg %p141
        %s355 = sand.u32 %s23, 1
        %s356 = scalar_lea.sflag [#allocation4], %s355
        %s357 = sand.u32 %s157, 1
        %s358 = smul.addr %s357, 512
        %s359 = scalar_lea.vmem [#allocation10], %s358
        %p360 = pneg %p170
        %p361 = pneg %p167
        %p362 = pneg %p191
        %p363 = pneg %p188
        %p364 = pneg %p217
        %p365 = pneg %p214
        %s366 = smul.u32 2, %s23
        %p367 = scmp.lt.s32.totalorder %s366, 11
        %s368 = scalar_select %p367, %s366, 11
        %s369 = smul.addr %s368, 2
        %s370 = scalar_lea.vmem %s8, %s369
        %s371 = smul.u32 2, %s23
        %s372 = smul.u32 2, %s23
        %p373 = scmp.lt.s32.totalorder %s372, 11
        %s374 = scalar_select %p373, %s372, 11
        %s375 = smul.addr %s374, 2
        %s376 = scalar_lea.vmem %s8, %s375
        %s377 = smul.u32 2, %s23
        %p379 = scmp.eq.s32.totalorder %s23, 0
        // Predicated region
        $region69: #{multi_head_forward.1} parent=47 // pred_check
          %p380 = pneg %p379
        $region70: #{multi_head_forward.1} parent=47 // pred_check_branch
          %382 = sbr.rel (%p380) target = $region72
        $region71: #{multi_head_forward.1} parent=47 // pred_region
          %v383 = vld [vmem:[%s0] sm:$0xff]
          %v384 = vld [vmem:[%s0 + $0x8] sm:$0xff]
          %v387 = vcombine.high %v383, %v383
          %v389 = vunpack.c.l.s4 1983009808
          %v390 = vunpack.c.0.s8 %v389
          %v391 = vlaneseq
          %v392 = vshrl.u32 %v391, 7
          %v393 = vsub.s32 %v390, %v392
          %v394 = vrot.slane %v383, %v393
          %v396 = vunpack.c.l.s4 1983009808
          %v397 = vunpack.c.0.s8 %v396
          %v398 = vlaneseq
          %v399 = vshrl.u32 %v398, 7
          %v400 = vsub.s32 %v397, %v399
          %v401 = vrot.slane %v387, %v400
          %v402 = vcombine.high %v394, %v394
          %v403 = vcombine.high %v401, %v401
          %v404 = vcombine.high %v384, %v384
          %v406 = vunpack.c.l.s4 1983009808
          %v407 = vunpack.c.0.s8 %v406
          %v408 = vlaneseq
          %v409 = vshrl.u32 %v408, 7
          %v410 = vsub.s32 %v407, %v409
          %v411 = vrot.slane %v384, %v410
          %v413 = vunpack.c.l.s4 1983009808
          %v414 = vunpack.c.0.s8 %v413
          %v415 = vlaneseq
          %v416 = vshrl.u32 %v415, 7
          %v417 = vsub.s32 %v414, %v416
          %v418 = vrot.slane %v404, %v417
          %v419 = vcombine.high %v411, %v411
          %v420 = vcombine.high %v418, %v418
          %v429 = vpack.c.bf16 %v394, %v394
          %v430 = vpack.c.bf16 %v402, %v402
          %v431 = vpack.c.bf16 %v401, %v401
          %v432 = vpack.c.bf16 %v403, %v403
          %v433 = vpack.c.bf16 %v411, %v411
          %v434 = vpack.c.bf16 %v419, %v419
          %v435 = vpack.c.bf16 %v418, %v418
          %v436 = vpack.c.bf16 %v420, %v420
          %v437 = vld [vmem:[#allocation3] sm:$0xf]
          %v438 = vld [vmem:[#allocation3 + $0x4] sm:$0xf]
          %v439 = vld [vmem:[#allocation3 + $0x8] sm:$0xf]
          %v440 = vld [vmem:[#allocation3 + $0xc] sm:$0xf]
          %v441 = vld [vmem:[#allocation3 + $0x10] sm:$0xf]
          %v442 = vld [vmem:[#allocation3 + $0x14] sm:$0xf]
          %v443 = vld [vmem:[#allocation3 + $0x18] sm:$0xf]
          %v444 = vld [vmem:[#allocation3 + $0x1c] sm:$0xf]
          %v445 = vld [vmem:[#allocation3 + $0x20] sm:$0xf]
          %v446 = vld [vmem:[#allocation3 + $0x24] sm:$0xf]
          %v447 = vld [vmem:[#allocation3 + $0x28] sm:$0xf]
          %v448 = vld [vmem:[#allocation3 + $0x2c] sm:$0xf]
          %v449 = vld [vmem:[#allocation3 + $0x30] sm:$0xf]
          %v450 = vld [vmem:[#allocation3 + $0x34] sm:$0xf]
          %v451 = vld [vmem:[#allocation3 + $0x38] sm:$0xf]
          %v452 = vld [vmem:[#allocation3 + $0x3c] sm:$0xf]
          %v453 = vld [vmem:[#allocation3 + $0x40] sm:$0xf]
          %v454 = vld [vmem:[#allocation3 + $0x44] sm:$0xf]
          %v455 = vld [vmem:[#allocation3 + $0x48] sm:$0xf]
          %v456 = vld [vmem:[#allocation3 + $0x4c] sm:$0xf]
          %v457 = vld [vmem:[#allocation3 + $0x50] sm:$0xf]
          %v458 = vld [vmem:[#allocation3 + $0x54] sm:$0xf]
          %v459 = vld [vmem:[#allocation3 + $0x58] sm:$0xf]
          %v460 = vld [vmem:[#allocation3 + $0x5c] sm:$0xf]
          %v461 = vld [vmem:[#allocation3 + $0x60] sm:$0xf]
          %v462 = vld [vmem:[#allocation3 + $0x64] sm:$0xf]
          %v463 = vld [vmem:[#allocation3 + $0x68] sm:$0xf]
          %v464 = vld [vmem:[#allocation3 + $0x6c] sm:$0xf]
          %v465 = vld [vmem:[#allocation3 + $0x70] sm:$0xf]
          %v466 = vld [vmem:[#allocation3 + $0x74] sm:$0xf]
          %v467 = vld [vmem:[#allocation3 + $0x78] sm:$0xf]
          %v468 = vld [vmem:[#allocation3 + $0x7c] sm:$0xf]
          %v469 = vld [vmem:[#allocation3 + $0x80] sm:$0xf]
          %v470 = vld [vmem:[#allocation3 + $0x84] sm:$0xf]
          %v471 = vld [vmem:[#allocation3 + $0x88] sm:$0xf]
          %v472 = vld [vmem:[#allocation3 + $0x8c] sm:$0xf]
          %v473 = vld [vmem:[#allocation3 + $0x90] sm:$0xf]
          %v474 = vld [vmem:[#allocation3 + $0x94] sm:$0xf]
          %v475 = vld [vmem:[#allocation3 + $0x98] sm:$0xf]
          %v476 = vld [vmem:[#allocation3 + $0x9c] sm:$0xf]
          %v477 = vld [vmem:[#allocation3 + $0xa0] sm:$0xf]
          %v478 = vld [vmem:[#allocation3 + $0xa4] sm:$0xf]
          %v479 = vld [vmem:[#allocation3 + $0xa8] sm:$0xf]
          %v480 = vld [vmem:[#allocation3 + $0xac] sm:$0xf]
          %v481 = vld [vmem:[#allocation3 + $0xb0] sm:$0xf]
          %v482 = vld [vmem:[#allocation3 + $0xb4] sm:$0xf]
          %v483 = vld [vmem:[#allocation3 + $0xb8] sm:$0xf]
          %v484 = vld [vmem:[#allocation3 + $0xbc] sm:$0xf]
          %v485 = vld [vmem:[#allocation3 + $0xc0] sm:$0xf]
          %v486 = vld [vmem:[#allocation3 + $0xc4] sm:$0xf]
          %v487 = vld [vmem:[#allocation3 + $0xc8] sm:$0xf]
          %v488 = vld [vmem:[#allocation3 + $0xcc] sm:$0xf]
          %v489 = vld [vmem:[#allocation3 + $0xd0] sm:$0xf]
          %v490 = vld [vmem:[#allocation3 + $0xd4] sm:$0xf]
          %v491 = vld [vmem:[#allocation3 + $0xd8] sm:$0xf]
          %v492 = vld [vmem:[#allocation3 + $0xdc] sm:$0xf]
          %v493 = vld [vmem:[#allocation3 + $0xe0] sm:$0xf]
          %v494 = vld [vmem:[#allocation3 + $0xe4] sm:$0xf]
          %v495 = vld [vmem:[#allocation3 + $0xe8] sm:$0xf]
          %v496 = vld [vmem:[#allocation3 + $0xec] sm:$0xf]
          %v497 = vld [vmem:[#allocation3 + $0xf0] sm:$0xf]
          %v498 = vld [vmem:[#allocation3 + $0xf4] sm:$0xf]
          %v499 = vld [vmem:[#allocation3 + $0xf8] sm:$0xf]
          %v500 = vld [vmem:[#allocation3 + $0xfc] sm:$0xf]
          %v501 = vld [vmem:[#allocation3 + $0x100] sm:$0xf]
          %v502 = vld [vmem:[#allocation3 + $0x104] sm:$0xf]
          %v503 = vld [vmem:[#allocation3 + $0x108] sm:$0xf]
          %v504 = vld [vmem:[#allocation3 + $0x10c] sm:$0xf]
          %v505 = vld [vmem:[#allocation3 + $0x110] sm:$0xf]
          %v506 = vld [vmem:[#allocation3 + $0x114] sm:$0xf]
          %v507 = vld [vmem:[#allocation3 + $0x118] sm:$0xf]
          %v508 = vld [vmem:[#allocation3 + $0x11c] sm:$0xf]
          %v509 = vld [vmem:[#allocation3 + $0x120] sm:$0xf]
          %v510 = vld [vmem:[#allocation3 + $0x124] sm:$0xf]
          %v511 = vld [vmem:[#allocation3 + $0x128] sm:$0xf]
          %v512 = vld [vmem:[#allocation3 + $0x12c] sm:$0xf]
          %v513 = vld [vmem:[#allocation3 + $0x130] sm:$0xf]
          %v514 = vld [vmem:[#allocation3 + $0x134] sm:$0xf]
          %v515 = vld [vmem:[#allocation3 + $0x138] sm:$0xf]
          %v516 = vld [vmem:[#allocation3 + $0x13c] sm:$0xf]
          %v517 = vld [vmem:[#allocation3 + $0x140] sm:$0xf]
          %v518 = vld [vmem:[#allocation3 + $0x144] sm:$0xf]
          %v519 = vld [vmem:[#allocation3 + $0x148] sm:$0xf]
          %v520 = vld [vmem:[#allocation3 + $0x14c] sm:$0xf]
          %v521 = vld [vmem:[#allocation3 + $0x150] sm:$0xf]
          %v522 = vld [vmem:[#allocation3 + $0x154] sm:$0xf]
          %v523 = vld [vmem:[#allocation3 + $0x158] sm:$0xf]
          %v524 = vld [vmem:[#allocation3 + $0x15c] sm:$0xf]
          %v525 = vld [vmem:[#allocation3 + $0x160] sm:$0xf]
          %v526 = vld [vmem:[#allocation3 + $0x164] sm:$0xf]
          %v527 = vld [vmem:[#allocation3 + $0x168] sm:$0xf]
          %v528 = vld [vmem:[#allocation3 + $0x16c] sm:$0xf]
          %v529 = vld [vmem:[#allocation3 + $0x170] sm:$0xf]
          %v530 = vld [vmem:[#allocation3 + $0x174] sm:$0xf]
          %v531 = vld [vmem:[#allocation3 + $0x178] sm:$0xf]
          %v532 = vld [vmem:[#allocation3 + $0x17c] sm:$0xf]
          %v533 = vld [vmem:[#allocation3 + $0x180] sm:$0xf]
          %v534 = vld [vmem:[#allocation3 + $0x184] sm:$0xf]
          %v535 = vld [vmem:[#allocation3 + $0x188] sm:$0xf]
          %v536 = vld [vmem:[#allocation3 + $0x18c] sm:$0xf]
          %v537 = vld [vmem:[#allocation3 + $0x190] sm:$0xf]
          %v538 = vld [vmem:[#allocation3 + $0x194] sm:$0xf]
          %v539 = vld [vmem:[#allocation3 + $0x198] sm:$0xf]
          %v540 = vld [vmem:[#allocation3 + $0x19c] sm:$0xf]
          %v541 = vld [vmem:[#allocation3 + $0x1a0] sm:$0xf]
          %v542 = vld [vmem:[#allocation3 + $0x1a4] sm:$0xf]
          %v543 = vld [vmem:[#allocation3 + $0x1a8] sm:$0xf]
          %v544 = vld [vmem:[#allocation3 + $0x1ac] sm:$0xf]
          %v545 = vld [vmem:[#allocation3 + $0x1b0] sm:$0xf]
          %v546 = vld [vmem:[#allocation3 + $0x1b4] sm:$0xf]
          %v547 = vld [vmem:[#allocation3 + $0x1b8] sm:$0xf]
          %v548 = vld [vmem:[#allocation3 + $0x1bc] sm:$0xf]
          %v549 = vld [vmem:[#allocation3 + $0x1c0] sm:$0xf]
          %v550 = vld [vmem:[#allocation3 + $0x1c4] sm:$0xf]
          %v551 = vld [vmem:[#allocation3 + $0x1c8] sm:$0xf]
          %v552 = vld [vmem:[#allocation3 + $0x1cc] sm:$0xf]
          %v553 = vld [vmem:[#allocation3 + $0x1d0] sm:$0xf]
          %v554 = vld [vmem:[#allocation3 + $0x1d4] sm:$0xf]
          %v555 = vld [vmem:[#allocation3 + $0x1d8] sm:$0xf]
          %v556 = vld [vmem:[#allocation3 + $0x1dc] sm:$0xf]
          %v557 = vld [vmem:[#allocation3 + $0x1e0] sm:$0xf]
          %v558 = vld [vmem:[#allocation3 + $0x1e4] sm:$0xf]
          %v559 = vld [vmem:[#allocation3 + $0x1e8] sm:$0xf]
          %v560 = vld [vmem:[#allocation3 + $0x1ec] sm:$0xf]
          %v561 = vld [vmem:[#allocation3 + $0x1f0] sm:$0xf]
          %v562 = vld [vmem:[#allocation3 + $0x1f4] sm:$0xf]
          %v563 = vld [vmem:[#allocation3 + $0x1f8] sm:$0xf]
          %v564 = vld [vmem:[#allocation3 + $0x1fc] sm:$0xf]
          %v565 = vld [vmem:[#allocation5] sm:$0x1]
          %v567 = vlaneseq
          %v568 = vshrl.u32 %v567, 7
          %v569 = vsub.s32 0, %v568
          %v570 = vrot.slane %v565, %v569
          %v700 = vunpack.c.l.b16 %v437
          %v701 = vunpack.c.l.b16 %v438
          %v702 = vunpack.c.l.b16 %v439
          %v703 = vunpack.c.l.b16 %v440
          %v704 = vunpack.c.l.b16 %v441
          %v705 = vunpack.c.l.b16 %v442
          %v706 = vunpack.c.l.b16 %v443
          %v707 = vunpack.c.l.b16 %v444
          %v708 = vunpack.c.l.b16 %v445
          %v709 = vunpack.c.l.b16 %v446
          %v710 = vunpack.c.l.b16 %v447
          %v711 = vunpack.c.l.b16 %v448
          %v712 = vunpack.c.l.b16 %v449
          %v713 = vunpack.c.l.b16 %v450
          %v714 = vunpack.c.l.b16 %v451
          %v715 = vunpack.c.l.b16 %v452
          %v716 = vunpack.c.l.b16 %v453
          %v717 = vunpack.c.l.b16 %v454
          %v718 = vunpack.c.l.b16 %v455
          %v719 = vunpack.c.l.b16 %v456
          %v720 = vunpack.c.l.b16 %v457
          %v721 = vunpack.c.l.b16 %v458
          %v722 = vunpack.c.l.b16 %v459
          %v723 = vunpack.c.l.b16 %v460
          %v724 = vunpack.c.l.b16 %v461
          %v725 = vunpack.c.l.b16 %v462
          %v726 = vunpack.c.l.b16 %v463
          %v727 = vunpack.c.l.b16 %v464
          %v728 = vunpack.c.l.b16 %v465
          %v729 = vunpack.c.l.b16 %v466
          %v730 = vunpack.c.l.b16 %v467
          %v731 = vunpack.c.l.b16 %v468
          %v732 = vunpack.c.l.b16 %v469
          %v733 = vunpack.c.l.b16 %v470
          %v734 = vunpack.c.l.b16 %v471
          %v735 = vunpack.c.l.b16 %v472
          %v736 = vunpack.c.l.b16 %v473
          %v737 = vunpack.c.l.b16 %v474
          %v738 = vunpack.c.l.b16 %v475
          %v739 = vunpack.c.l.b16 %v476
          %v740 = vunpack.c.l.b16 %v477
          %v741 = vunpack.c.l.b16 %v478
          %v742 = vunpack.c.l.b16 %v479
          %v743 = vunpack.c.l.b16 %v480
          %v744 = vunpack.c.l.b16 %v481
          %v745 = vunpack.c.l.b16 %v482
          %v746 = vunpack.c.l.b16 %v483
          %v747 = vunpack.c.l.b16 %v484
          %v748 = vunpack.c.l.b16 %v485
          %v749 = vunpack.c.l.b16 %v486
          %v750 = vunpack.c.l.b16 %v487
          %v751 = vunpack.c.l.b16 %v488
          %v752 = vunpack.c.l.b16 %v489
          %v753 = vunpack.c.l.b16 %v490
          %v754 = vunpack.c.l.b16 %v491
          %v755 = vunpack.c.l.b16 %v492
          %v756 = vunpack.c.l.b16 %v493
          %v757 = vunpack.c.l.b16 %v494
          %v758 = vunpack.c.l.b16 %v495
          %v759 = vunpack.c.l.b16 %v496
          %v760 = vunpack.c.l.b16 %v497
          %v761 = vunpack.c.l.b16 %v498
          %v762 = vunpack.c.l.b16 %v499
          %v763 = vunpack.c.l.b16 %v500
          %v764 = vunpack.c.l.b16 %v501
          %v765 = vunpack.c.l.b16 %v502
          %v766 = vunpack.c.l.b16 %v503
          %v767 = vunpack.c.l.b16 %v504
          %v768 = vunpack.c.l.b16 %v505
          %v769 = vunpack.c.l.b16 %v506
          %v770 = vunpack.c.l.b16 %v507
          %v771 = vunpack.c.l.b16 %v508
          %v772 = vunpack.c.l.b16 %v509
          %v773 = vunpack.c.l.b16 %v510
          %v774 = vunpack.c.l.b16 %v511
          %v775 = vunpack.c.l.b16 %v512
          %v776 = vunpack.c.l.b16 %v513
          %v777 = vunpack.c.l.b16 %v514
          %v778 = vunpack.c.l.b16 %v515
          %v779 = vunpack.c.l.b16 %v516
          %v780 = vunpack.c.l.b16 %v517
          %v781 = vunpack.c.l.b16 %v518
          %v782 = vunpack.c.l.b16 %v519
          %v783 = vunpack.c.l.b16 %v520
          %v784 = vunpack.c.l.b16 %v521
          %v785 = vunpack.c.l.b16 %v522
          %v786 = vunpack.c.l.b16 %v523
          %v787 = vunpack.c.l.b16 %v524
          %v788 = vunpack.c.l.b16 %v525
          %v789 = vunpack.c.l.b16 %v526
          %v790 = vunpack.c.l.b16 %v527
          %v791 = vunpack.c.l.b16 %v528
          %v792 = vunpack.c.l.b16 %v529
          %v793 = vunpack.c.l.b16 %v530
          %v794 = vunpack.c.l.b16 %v531
          %v795 = vunpack.c.l.b16 %v532
          %v796 = vunpack.c.l.b16 %v533
          %v797 = vunpack.c.l.b16 %v534
          %v798 = vunpack.c.l.b16 %v535
          %v799 = vunpack.c.l.b16 %v536
          %v800 = vunpack.c.l.b16 %v537
          %v801 = vunpack.c.l.b16 %v538
          %v802 = vunpack.c.l.b16 %v539
          %v803 = vunpack.c.l.b16 %v540
          %v804 = vunpack.c.l.b16 %v541
          %v805 = vunpack.c.l.b16 %v542
          %v806 = vunpack.c.l.b16 %v543
          %v807 = vunpack.c.l.b16 %v544
          %v808 = vunpack.c.l.b16 %v545
          %v809 = vunpack.c.l.b16 %v546
          %v810 = vunpack.c.l.b16 %v547
          %v811 = vunpack.c.l.b16 %v548
          %v812 = vunpack.c.l.b16 %v549
          %v813 = vunpack.c.l.b16 %v550
          %v814 = vunpack.c.l.b16 %v551
          %v815 = vunpack.c.l.b16 %v552
          %v816 = vunpack.c.l.b16 %v553
          %v817 = vunpack.c.l.b16 %v554
          %v818 = vunpack.c.l.b16 %v555
          %v819 = vunpack.c.l.b16 %v556
          %v820 = vunpack.c.l.b16 %v557
          %v821 = vunpack.c.l.b16 %v558
          %v822 = vunpack.c.l.b16 %v559
          %v823 = vunpack.c.l.b16 %v560
          %v824 = vunpack.c.l.b16 %v561
          %v825 = vunpack.c.l.b16 %v562
          %v826 = vunpack.c.l.b16 %v563
          %v827 = vunpack.c.l.b16 %v564
          %v828 = vpack.c.b16 %v701, %v700
          %v829 = vpack.c.b16 %v703, %v702
          %v830 = vpack.c.b16 %v705, %v704
          %v831 = vpack.c.b16 %v707, %v706
          %v832 = vpack.c.b16 %v709, %v708
          %v833 = vpack.c.b16 %v711, %v710
          %v834 = vpack.c.b16 %v713, %v712
          %v835 = vpack.c.b16 %v715, %v714
          %v836 = vpack.c.b16 %v717, %v716
          %v837 = vpack.c.b16 %v719, %v718
          %v838 = vpack.c.b16 %v721, %v720
          %v839 = vpack.c.b16 %v723, %v722
          %v840 = vpack.c.b16 %v725, %v724
          %v841 = vpack.c.b16 %v727, %v726
          %v842 = vpack.c.b16 %v729, %v728
          %v843 = vpack.c.b16 %v731, %v730
          %v844 = vpack.c.b16 %v733, %v732
          %v845 = vpack.c.b16 %v735, %v734
          %v846 = vpack.c.b16 %v737, %v736
          %v847 = vpack.c.b16 %v739, %v738
          %v848 = vpack.c.b16 %v741, %v740
          %v849 = vpack.c.b16 %v743, %v742
          %v850 = vpack.c.b16 %v745, %v744
          %v851 = vpack.c.b16 %v747, %v746
          %v852 = vpack.c.b16 %v749, %v748
          %v853 = vpack.c.b16 %v751, %v750
          %v854 = vpack.c.b16 %v753, %v752
          %v855 = vpack.c.b16 %v755, %v754
          %v856 = vpack.c.b16 %v757, %v756
          %v857 = vpack.c.b16 %v759, %v758
          %v858 = vpack.c.b16 %v761, %v760
          %v859 = vpack.c.b16 %v763, %v762
          %v860 = vpack.c.b16 %v765, %v764
          %v861 = vpack.c.b16 %v767, %v766
          %v862 = vpack.c.b16 %v769, %v768
          %v863 = vpack.c.b16 %v771, %v770
          %v864 = vpack.c.b16 %v773, %v772
          %v865 = vpack.c.b16 %v775, %v774
          %v866 = vpack.c.b16 %v777, %v776
          %v867 = vpack.c.b16 %v779, %v778
          %v868 = vpack.c.b16 %v781, %v780
          %v869 = vpack.c.b16 %v783, %v782
          %v870 = vpack.c.b16 %v785, %v784
          %v871 = vpack.c.b16 %v787, %v786
          %v872 = vpack.c.b16 %v789, %v788
          %v873 = vpack.c.b16 %v791, %v790
          %v874 = vpack.c.b16 %v793, %v792
          %v875 = vpack.c.b16 %v795, %v794
          %v876 = vpack.c.b16 %v797, %v796
          %v877 = vpack.c.b16 %v799, %v798
          %v878 = vpack.c.b16 %v801, %v800
          %v879 = vpack.c.b16 %v803, %v802
          %v880 = vpack.c.b16 %v805, %v804
          %v881 = vpack.c.b16 %v807, %v806
          %v882 = vpack.c.b16 %v809, %v808
          %v883 = vpack.c.b16 %v811, %v810
          %v884 = vpack.c.b16 %v813, %v812
          %v885 = vpack.c.b16 %v815, %v814
          %v886 = vpack.c.b16 %v817, %v816
          %v887 = vpack.c.b16 %v819, %v818
          %v888 = vpack.c.b16 %v821, %v820
          %v889 = vpack.c.b16 %v823, %v822
          %v890 = vpack.c.b16 %v825, %v824
          %v891 = vpack.c.b16 %v827, %v826
          %956 = vmatprep.subr.bf16.mxu0 0
          %957 = vmatpush1.bf16.msra.mxu0 %v828
          %958 = vmatprep.subr.bf16.mxu0 0
          %959 = vmatpush1.bf16.msra.mxu0 %v829
          %960 = vmatprep.subr.bf16.mxu0 0
          %961 = vmatpush1.bf16.msra.mxu0 %v830
          %962 = vmatprep.subr.bf16.mxu0 0
          %963 = vmatpush1.bf16.msra.mxu0 %v831
          %964 = vmatprep.subr.bf16.mxu0 0
          %965 = vmatpush1.bf16.msra.mxu0 %v832
          %966 = vmatprep.subr.bf16.mxu0 0
          %967 = vmatpush1.bf16.msra.mxu0 %v833
          %968 = vmatprep.subr.bf16.mxu0 0
          %969 = vmatpush1.bf16.msra.mxu0 %v834
          %970 = vmatprep.subr.bf16.mxu0 0
          %971 = vmatpush1.bf16.msra.mxu0 %v835
          %972 = vmatprep.subr.bf16.mxu0 0
          %973 = vmatpush1.bf16.msra.mxu0 %v836
          %974 = vmatprep.subr.bf16.mxu0 0
          %975 = vmatpush1.bf16.msra.mxu0 %v837
          %976 = vmatprep.subr.bf16.mxu0 0
          %977 = vmatpush1.bf16.msra.mxu0 %v838
          %978 = vmatprep.subr.bf16.mxu0 0
          %979 = vmatpush1.bf16.msra.mxu0 %v839
          %980 = vmatprep.subr.bf16.mxu0 0
          %981 = vmatpush1.bf16.msra.mxu0 %v840
          %982 = vmatprep.subr.bf16.mxu0 0
          %983 = vmatpush1.bf16.msra.mxu0 %v841
          %984 = vmatprep.subr.bf16.mxu0 0
          %985 = vmatpush1.bf16.msra.mxu0 %v842
          %986 = vmatprep.subr.bf16.mxu0 0
          %987 = vmatpush1.bf16.msra.mxu0 %v843
          %988 = vmatprep.mubr.bf16.mxu0 %v430
          %989 = vmatmul.mubr.bf16.gmra.mrb[0].mxu0 %v429
          %v990 = vpop.f32.mrb[0].mxu0
          %v991 = vadd.f32 %v570, %v990
          %v992 = vpop.f32.mrb[0].mxu0
          %v993 = vpop.f32.mrb[0].mxu0
          %v994 = vpop.f32.mrb[0].mxu0
          %995 = vdwg.mxu0
          %996 = vmatprep.subr.bf16.mxu0 0
          %997 = vmatpush1.bf16.msra.mxu0 %v844
          %998 = vmatprep.subr.bf16.mxu0 0
          %999 = vmatpush1.bf16.msra.mxu0 %v845
          %1000 = vmatprep.subr.bf16.mxu0 0
          %1001 = vmatpush1.bf16.msra.mxu0 %v846
          %1002 = vmatprep.subr.bf16.mxu0 0
          %1003 = vmatpush1.bf16.msra.mxu0 %v847
          %1004 = vmatprep.subr.bf16.mxu0 0
          %1005 = vmatpush1.bf16.msra.mxu0 %v848
          %1006 = vmatprep.subr.bf16.mxu0 0
          %1007 = vmatpush1.bf16.msra.mxu0 %v849
          %1008 = vmatprep.subr.bf16.mxu0 0
          %1009 = vmatpush1.bf16.msra.mxu0 %v850
          %1010 = vmatprep.subr.bf16.mxu0 0
          %1011 = vmatpush1.bf16.msra.mxu0 %v851
          %1012 = vmatprep.subr.bf16.mxu0 0
          %1013 = vmatpush1.bf16.msra.mxu0 %v852
          %1014 = vmatprep.subr.bf16.mxu0 0
          %1015 = vmatpush1.bf16.msra.mxu0 %v853
          %1016 = vmatprep.subr.bf16.mxu0 0
          %1017 = vmatpush1.bf16.msra.mxu0 %v854
          %1018 = vmatprep.subr.bf16.mxu0 0
          %1019 = vmatpush1.bf16.msra.mxu0 %v855
          %1020 = vmatprep.subr.bf16.mxu0 0
          %1021 = vmatpush1.bf16.msra.mxu0 %v856
          %1022 = vmatprep.subr.bf16.mxu0 0
          %1023 = vmatpush1.bf16.msra.mxu0 %v857
          %1024 = vmatprep.subr.bf16.mxu0 0
          %1025 = vmatpush1.bf16.msra.mxu0 %v858
          %1026 = vmatprep.subr.bf16.mxu0 0
          %1027 = vmatpush1.bf16.msra.mxu0 %v859
          %1028 = vmatprep.mubr.bf16.mxu0 %v432
          %1029 = vmatmul.mubr.bf16.gmra.mrb[0].mxu0 %v431
          %v1030 = vpop.f32.mrb[0].mxu0
          %v1031 = vadd.f32 %v991, %v1030
          %v1032 = vpop.f32.mrb[0].mxu0
          %v1033 = vpop.f32.mrb[0].mxu0
          %v1034 = vpop.f32.mrb[0].mxu0
          %1035 = vdwg.mxu0
          %1036 = vmatprep.subr.bf16.mxu0 0
          %1037 = vmatpush1.bf16.msra.mxu0 %v860
          %1038 = vmatprep.subr.bf16.mxu0 0
          %1039 = vmatpush1.bf16.msra.mxu0 %v861
          %1040 = vmatprep.subr.bf16.mxu0 0
          %1041 = vmatpush1.bf16.msra.mxu0 %v862
          %1042 = vmatprep.subr.bf16.mxu0 0
          %1043 = vmatpush1.bf16.msra.mxu0 %v863
          %1044 = vmatprep.subr.bf16.mxu0 0
          %1045 = vmatpush1.bf16.msra.mxu0 %v864
          %1046 = vmatprep.subr.bf16.mxu0 0
          %1047 = vmatpush1.bf16.msra.mxu0 %v865
          %1048 = vmatprep.subr.bf16.mxu0 0
          %1049 = vmatpush1.bf16.msra.mxu0 %v866
          %1050 = vmatprep.subr.bf16.mxu0 0
          %1051 = vmatpush1.bf16.msra.mxu0 %v867
          %1052 = vmatprep.subr.bf16.mxu0 0
          %1053 = vmatpush1.bf16.msra.mxu0 %v868
          %1054 = vmatprep.subr.bf16.mxu0 0
          %1055 = vmatpush1.bf16.msra.mxu0 %v869
          %1056 = vmatprep.subr.bf16.mxu0 0
          %1057 = vmatpush1.bf16.msra.mxu0 %v870
          %1058 = vmatprep.subr.bf16.mxu0 0
          %1059 = vmatpush1.bf16.msra.mxu0 %v871
          %1060 = vmatprep.subr.bf16.mxu0 0
          %1061 = vmatpush1.bf16.msra.mxu0 %v872
          %1062 = vmatprep.subr.bf16.mxu0 0
          %1063 = vmatpush1.bf16.msra.mxu0 %v873
          %1064 = vmatprep.subr.bf16.mxu0 0
          %1065 = vmatpush1.bf16.msra.mxu0 %v874
          %1066 = vmatprep.subr.bf16.mxu0 0
          %1067 = vmatpush1.bf16.msra.mxu0 %v875
          %1068 = vmatprep.mubr.bf16.mxu0 %v434
          %1069 = vmatmul.mubr.bf16.gmra.mrb[0].mxu0 %v433
          %v1070 = vpop.f32.mrb[0].mxu0
          %v1071 = vadd.f32 %v1031, %v1070
          %v1072 = vpop.f32.mrb[0].mxu0
          %v1073 = vpop.f32.mrb[0].mxu0
          %v1074 = vpop.f32.mrb[0].mxu0
          %1075 = vdwg.mxu0
          %1076 = vmatprep.subr.bf16.mxu0 0
          %1077 = vmatpush1.bf16.msra.mxu0 %v876
          %1078 = vmatprep.subr.bf16.mxu0 0
          %1079 = vmatpush1.bf16.msra.mxu0 %v877
          %1080 = vmatprep.subr.bf16.mxu0 0
          %1081 = vmatpush1.bf16.msra.mxu0 %v878
          %1082 = vmatprep.subr.bf16.mxu0 0
          %1083 = vmatpush1.bf16.msra.mxu0 %v879
          %1084 = vmatprep.subr.bf16.mxu0 0
          %1085 = vmatpush1.bf16.msra.mxu0 %v880
          %1086 = vmatprep.subr.bf16.mxu0 0
          %1087 = vmatpush1.bf16.msra.mxu0 %v881
          %1088 = vmatprep.subr.bf16.mxu0 0
          %1089 = vmatpush1.bf16.msra.mxu0 %v882
          %1090 = vmatprep.subr.bf16.mxu0 0
          %1091 = vmatpush1.bf16.msra.mxu0 %v883
          %1092 = vmatprep.subr.bf16.mxu0 0
          %1093 = vmatpush1.bf16.msra.mxu0 %v884
          %1094 = vmatprep.subr.bf16.mxu0 0
          %1095 = vmatpush1.bf16.msra.mxu0 %v885
          %1096 = vmatprep.subr.bf16.mxu0 0
          %1097 = vmatpush1.bf16.msra.mxu0 %v886
          %1098 = vmatprep.subr.bf16.mxu0 0
          %1099 = vmatpush1.bf16.msra.mxu0 %v887
          %1100 = vmatprep.subr.bf16.mxu0 0
          %1101 = vmatpush1.bf16.msra.mxu0 %v888
          %1102 = vmatprep.subr.bf16.mxu0 0
          %1103 = vmatpush1.bf16.msra.mxu0 %v889
          %1104 = vmatprep.subr.bf16.mxu0 0
          %1105 = vmatpush1.bf16.msra.mxu0 %v890
          %1106 = vmatprep.subr.bf16.mxu0 0
          %1107 = vmatpush1.bf16.msra.mxu0 %v891
          %1108 = vmatprep.mubr.bf16.mxu0 %v436
          %1109 = vmatmul.mubr.bf16.gmra.mrb[0].mxu0 %v435
          %v1110 = vpop.f32.mrb[0].mxu0
          %v1111 = vadd.f32 %v1071, %v1110
          %v1112 = vpop.f32.mrb[0].mxu0
          %v1113 = vpop.f32.mrb[0].mxu0
          %v1114 = vpop.f32.mrb[0].mxu0
          %1115 = vdwg.mxu0
          %v1116 = vmax.f32 %v1111, 0.0
          %v1117 = vpack.c.bf16 %v1116, %v1116
          %v1118 = vld [vmem:[#allocation7] sm:$0xff]
          %v1119 = vld [vmem:[#allocation7 + $0x8] sm:$0xff]
          %v1120 = vld [vmem:[#allocation7 + $0x10] sm:$0xff]
          %v1121 = vld [vmem:[#allocation7 + $0x18] sm:$0xff]
          %v1122 = vld [vmem:[#allocation7 + $0x20] sm:$0xff]
          %v1123 = vld [vmem:[#allocation7 + $0x28] sm:$0xff]
          %v1124 = vld [vmem:[#allocation7 + $0x30] sm:$0xff]
          %v1125 = vld [vmem:[#allocation7 + $0x38] sm:$0xff]
          %v1126 = vld [vmem:[#allocation7 + $0x40] sm:$0xff]
          %v1127 = vld [vmem:[#allocation7 + $0x48] sm:$0xff]
          %v1128 = vld [vmem:[#allocation7 + $0x50] sm:$0xff]
          %v1129 = vld [vmem:[#allocation7 + $0x58] sm:$0xff]
          %v1130 = vld [vmem:[#allocation7 + $0x60] sm:$0xff]
          %v1131 = vld [vmem:[#allocation7 + $0x68] sm:$0xff]
          %v1132 = vld [vmem:[#allocation7 + $0x70] sm:$0xff]
          %v1133 = vld [vmem:[#allocation7 + $0x78] sm:$0xff]
          %v1134 = vld [vmem:[#allocation7 + $0x80] sm:$0xff]
          %v1135 = vld [vmem:[#allocation7 + $0x88] sm:$0xff]
          %v1136 = vld [vmem:[#allocation7 + $0x90] sm:$0xff]
          %v1137 = vld [vmem:[#allocation7 + $0x98] sm:$0xff]
          %v1138 = vld [vmem:[#allocation7 + $0xa0] sm:$0xff]
          %v1139 = vld [vmem:[#allocation7 + $0xa8] sm:$0xff]
          %v1140 = vld [vmem:[#allocation7 + $0xb0] sm:$0xff]
          %v1141 = vld [vmem:[#allocation7 + $0xb8] sm:$0xff]
          %v1142 = vld [vmem:[#allocation7 + $0xc0] sm:$0xff]
          %v1143 = vld [vmem:[#allocation7 + $0xc8] sm:$0xff]
          %v1144 = vld [vmem:[#allocation7 + $0xd0] sm:$0xff]
          %v1145 = vld [vmem:[#allocation7 + $0xd8] sm:$0xff]
          %v1146 = vld [vmem:[#allocation7 + $0xe0] sm:$0xff]
          %v1147 = vld [vmem:[#allocation7 + $0xe8] sm:$0xff]
          %v1148 = vld [vmem:[#allocation7 + $0xf0] sm:$0xff]
          %v1149 = vld [vmem:[#allocation7 + $0xf8] sm:$0xff]
          %v1150 = vld [vmem:[#allocation7 + $0x100] sm:$0xff]
          %v1151 = vld [vmem:[#allocation7 + $0x108] sm:$0xff]
          %v1152 = vld [vmem:[#allocation7 + $0x110] sm:$0xff]
          %v1153 = vld [vmem:[#allocation7 + $0x118] sm:$0xff]
          %v1154 = vld [vmem:[#allocation7 + $0x120] sm:$0xff]
          %v1155 = vld [vmem:[#allocation7 + $0x128] sm:$0xff]
          %v1156 = vld [vmem:[#allocation7 + $0x130] sm:$0xff]
          %v1157 = vld [vmem:[#allocation7 + $0x138] sm:$0xff]
          %v1158 = vld [vmem:[#allocation7 + $0x140] sm:$0xff]
          %v1159 = vld [vmem:[#allocation7 + $0x148] sm:$0xff]
          %v1160 = vld [vmem:[#allocation7 + $0x150] sm:$0xff]
          %v1161 = vld [vmem:[#allocation7 + $0x158] sm:$0xff]
          %v1162 = vld [vmem:[#allocation7 + $0x160] sm:$0xff]
          %v1163 = vld [vmem:[#allocation7 + $0x168] sm:$0xff]
          %v1164 = vld [vmem:[#allocation7 + $0x170] sm:$0xff]
          %v1165 = vld [vmem:[#allocation7 + $0x178] sm:$0xff]
          %v1166 = vld [vmem:[#allocation7 + $0x180] sm:$0xff]
          %v1167 = vld [vmem:[#allocation7 + $0x188] sm:$0xff]
          %v1168 = vld [vmem:[#allocation7 + $0x190] sm:$0xff]
          %v1169 = vld [vmem:[#allocation7 + $0x198] sm:$0xff]
          %v1170 = vld [vmem:[#allocation7 + $0x1a0] sm:$0xff]
          %v1171 = vld [vmem:[#allocation7 + $0x1a8] sm:$0xff]
          %v1172 = vld [vmem:[#allocation7 + $0x1b0] sm:$0xff]
          %v1173 = vld [vmem:[#allocation7 + $0x1b8] sm:$0xff]
          %v1174 = vld [vmem:[#allocation7 + $0x1c0] sm:$0xff]
          %v1175 = vld [vmem:[#allocation7 + $0x1c8] sm:$0xff]
          %v1176 = vld [vmem:[#allocation7 + $0x1d0] sm:$0xff]
          %v1177 = vld [vmem:[#allocation7 + $0x1d8] sm:$0xff]
          %v1178 = vld [vmem:[#allocation7 + $0x1e0] sm:$0xff]
          %v1179 = vld [vmem:[#allocation7 + $0x1e8] sm:$0xff]
          %v1180 = vld [vmem:[#allocation7 + $0x1f0] sm:$0xff]
          %v1181 = vld [vmem:[#allocation7 + $0x1f8] sm:$0xff]
          %v1182 = vld [vmem:[#allocation8] sm:$0xff]
          %v1184 = vlaneseq
          %v1185 = vshrl.u32 %v1184, 7
          %v1186 = vsub.s32 0, %v1185
          %v1187 = vrot.slane %v1182, %v1186
          %v1188 = vlaneseq
          %v1189 = vshrl.u32 %v1188, 7
          %v1190 = vsub.s32 1, %v1189
          %v1191 = vrot.slane %v1182, %v1190
          %v1192 = vlaneseq
          %v1193 = vshrl.u32 %v1192, 7
          %v1194 = vsub.s32 2, %v1193
          %v1195 = vrot.slane %v1182, %v1194
          %v1196 = vlaneseq
          %v1197 = vshrl.u32 %v1196, 7
          %v1198 = vsub.s32 3, %v1197
          %v1199 = vrot.slane %v1182, %v1198
          %v1200 = vlaneseq
          %v1201 = vshrl.u32 %v1200, 7
          %v1202 = vsub.s32 4, %v1201
          %v1203 = vrot.slane %v1182, %v1202
          %v1204 = vlaneseq
          %v1205 = vshrl.u32 %v1204, 7
          %v1206 = vsub.s32 5, %v1205
          %v1207 = vrot.slane %v1182, %v1206
          %v1208 = vlaneseq
          %v1209 = vshrl.u32 %v1208, 7
          %v1210 = vsub.s32 6, %v1209
          %v1211 = vrot.slane %v1182, %v1210
          %v1212 = vlaneseq
          %v1213 = vshrl.u32 %v1212, 7
          %v1214 = vsub.s32 7, %v1213
          %v1215 = vrot.slane %v1182, %v1214
          %v1288 = vunpack.c.l.b16 %v1118
          %v1289 = vunpack.c.h.b16 %v1118
          %v1290 = vunpack.c.l.b16 %v1119
          %v1291 = vunpack.c.h.b16 %v1119
          %v1292 = vunpack.c.l.b16 %v1120
          %v1293 = vunpack.c.h.b16 %v1120
          %v1294 = vunpack.c.l.b16 %v1121
          %v1295 = vunpack.c.h.b16 %v1121
          %v1296 = vunpack.c.l.b16 %v1122
          %v1297 = vunpack.c.h.b16 %v1122
          %v1298 = vunpack.c.l.b16 %v1123
          %v1299 = vunpack.c.h.b16 %v1123
          %v1300 = vunpack.c.l.b16 %v1124
          %v1301 = vunpack.c.h.b16 %v1124
          %v1302 = vunpack.c.l.b16 %v1125
          %v1303 = vunpack.c.h.b16 %v1125
          %v1304 = vunpack.c.l.b16 %v1126
          %v1305 = vunpack.c.h.b16 %v1126
          %v1306 = vunpack.c.l.b16 %v1127
          %v1307 = vunpack.c.h.b16 %v1127
          %v1308 = vunpack.c.l.b16 %v1128
          %v1309 = vunpack.c.h.b16 %v1128
          %v1310 = vunpack.c.l.b16 %v1129
          %v1311 = vunpack.c.h.b16 %v1129
          %v1312 = vunpack.c.l.b16 %v1130
          %v1313 = vunpack.c.h.b16 %v1130
          %v1314 = vunpack.c.l.b16 %v1131
          %v1315 = vunpack.c.h.b16 %v1131
          %v1316 = vunpack.c.l.b16 %v1132
          %v1317 = vunpack.c.h.b16 %v1132
          %v1318 = vunpack.c.l.b16 %v1133
          %v1319 = vunpack.c.h.b16 %v1133
          %v1320 = vunpack.c.l.b16 %v1134
          %v1321 = vunpack.c.h.b16 %v1134
          %v1322 = vunpack.c.l.b16 %v1135
          %v1323 = vunpack.c.h.b16 %v1135
          %v1324 = vunpack.c.l.b16 %v1136
          %v1325 = vunpack.c.h.b16 %v1136
          %v1326 = vunpack.c.l.b16 %v1137
          %v1327 = vunpack.c.h.b16 %v1137
          %v1328 = vunpack.c.l.b16 %v1138
          %v1329 = vunpack.c.h.b16 %v1138
          %v1330 = vunpack.c.l.b16 %v1139
          %v1331 = vunpack.c.h.b16 %v1139
          %v1332 = vunpack.c.l.b16 %v1140
          %v1333 = vunpack.c.h.b16 %v1140
          %v1334 = vunpack.c.l.b16 %v1141
          %v1335 = vunpack.c.h.b16 %v1141
          %v1336 = vunpack.c.l.b16 %v1142
          %v1337 = vunpack.c.h.b16 %v1142
          %v1338 = vunpack.c.l.b16 %v1143
          %v1339 = vunpack.c.h.b16 %v1143
          %v1340 = vunpack.c.l.b16 %v1144
          %v1341 = vunpack.c.h.b16 %v1144
          %v1342 = vunpack.c.l.b16 %v1145
          %v1343 = vunpack.c.h.b16 %v1145
          %v1344 = vunpack.c.l.b16 %v1146
          %v1345 = vunpack.c.h.b16 %v1146
          %v1346 = vunpack.c.l.b16 %v1147
          %v1347 = vunpack.c.h.b16 %v1147
          %v1348 = vunpack.c.l.b16 %v1148
          %v1349 = vunpack.c.h.b16 %v1148
          %v1350 = vunpack.c.l.b16 %v1149
          %v1351 = vunpack.c.h.b16 %v1149
          %v1352 = vunpack.c.l.b16 %v1150
          %v1353 = vunpack.c.h.b16 %v1150
          %v1354 = vunpack.c.l.b16 %v1151
          %v1355 = vunpack.c.h.b16 %v1151
          %v1356 = vunpack.c.l.b16 %v1152
          %v1357 = vunpack.c.h.b16 %v1152
          %v1358 = vunpack.c.l.b16 %v1153
          %v1359 = vunpack.c.h.b16 %v1153
          %v1360 = vunpack.c.l.b16 %v1154
          %v1361 = vunpack.c.h.b16 %v1154
          %v1362 = vunpack.c.l.b16 %v1155
          %v1363 = vunpack.c.h.b16 %v1155
          %v1364 = vunpack.c.l.b16 %v1156
          %v1365 = vunpack.c.h.b16 %v1156
          %v1366 = vunpack.c.l.b16 %v1157
          %v1367 = vunpack.c.h.b16 %v1157
          %v1368 = vunpack.c.l.b16 %v1158
          %v1369 = vunpack.c.h.b16 %v1158
          %v1370 = vunpack.c.l.b16 %v1159
          %v1371 = vunpack.c.h.b16 %v1159
          %v1372 = vunpack.c.l.b16 %v1160
          %v1373 = vunpack.c.h.b16 %v1160
          %v1374 = vunpack.c.l.b16 %v1161
          %v1375 = vunpack.c.h.b16 %v1161
          %v1376 = vunpack.c.l.b16 %v1162
          %v1377 = vunpack.c.h.b16 %v1162
          %v1378 = vunpack.c.l.b16 %v1163
          %v1379 = vunpack.c.h.b16 %v1163
          %v1380 = vunpack.c.l.b16 %v1164
          %v1381 = vunpack.c.h.b16 %v1164
          %v1382 = vunpack.c.l.b16 %v1165
          %v1383 = vunpack.c.h.b16 %v1165
          %v1384 = vunpack.c.l.b16 %v1166
          %v1385 = vunpack.c.h.b16 %v1166
          %v1386 = vunpack.c.l.b16 %v1167
          %v1387 = vunpack.c.h.b16 %v1167
          %v1388 = vunpack.c.l.b16 %v1168
          %v1389 = vunpack.c.h.b16 %v1168
          %v1390 = vunpack.c.l.b16 %v1169
          %v1391 = vunpack.c.h.b16 %v1169
          %v1392 = vunpack.c.l.b16 %v1170
          %v1393 = vunpack.c.h.b16 %v1170
          %v1394 = vunpack.c.l.b16 %v1171
          %v1395 = vunpack.c.h.b16 %v1171
          %v1396 = vunpack.c.l.b16 %v1172
          %v1397 = vunpack.c.h.b16 %v1172
          %v1398 = vunpack.c.l.b16 %v1173
          %v1399 = vunpack.c.h.b16 %v1173
          %v1400 = vunpack.c.l.b16 %v1174
          %v1401 = vunpack.c.h.b16 %v1174
          %v1402 = vunpack.c.l.b16 %v1175
          %v1403 = vunpack.c.h.b16 %v1175
          %v1404 = vunpack.c.l.b16 %v1176
          %v1405 = vunpack.c.h.b16 %v1176
          %v1406 = vunpack.c.l.b16 %v1177
          %v1407 = vunpack.c.h.b16 %v1177
          %v1408 = vunpack.c.l.b16 %v1178
          %v1409 = vunpack.c.h.b16 %v1178
          %v1410 = vunpack.c.l.b16 %v1179
          %v1411 = vunpack.c.h.b16 %v1179
          %v1412 = vunpack.c.l.b16 %v1180
          %v1413 = vunpack.c.h.b16 %v1180
          %v1414 = vunpack.c.l.b16 %v1181
          %v1415 = vunpack.c.h.b16 %v1181
          %v1416 = vpack.c.b16 %v1296, %v1288
          %v1417 = vpack.c.b16 %v1297, %v1289
          %v1418 = vpack.c.b16 %v1298, %v1290
          %v1419 = vpack.c.b16 %v1299, %v1291
          %v1420 = vpack.c.b16 %v1300, %v1292
          %v1421 = vpack.c.b16 %v1301, %v1293
          %v1422 = vpack.c.b16 %v1302, %v1294
          %v1423 = vpack.c.b16 %v1303, %v1295
          %v1424 = vpack.c.b16 %v1312, %v1304
          %v1425 = vpack.c.b16 %v1313, %v1305
          %v1426 = vpack.c.b16 %v1314, %v1306
          %v1427 = vpack.c.b16 %v1315, %v1307
          %v1428 = vpack.c.b16 %v1316, %v1308
          %v1429 = vpack.c.b16 %v1317, %v1309
          %v1430 = vpack.c.b16 %v1318, %v1310
          %v1431 = vpack.c.b16 %v1319, %v1311
          %v1432 = vpack.c.b16 %v1328, %v1320
          %v1433 = vpack.c.b16 %v1329, %v1321
          %v1434 = vpack.c.b16 %v1330, %v1322
          %v1435 = vpack.c.b16 %v1331, %v1323
          %v1436 = vpack.c.b16 %v1332, %v1324
          %v1437 = vpack.c.b16 %v1333, %v1325
          %v1438 = vpack.c.b16 %v1334, %v1326
          %v1439 = vpack.c.b16 %v1335, %v1327
          %v1440 = vpack.c.b16 %v1344, %v1336
          %v1441 = vpack.c.b16 %v1345, %v1337
          %v1442 = vpack.c.b16 %v1346, %v1338
          %v1443 = vpack.c.b16 %v1347, %v1339
          %v1444 = vpack.c.b16 %v1348, %v1340
          %v1445 = vpack.c.b16 %v1349, %v1341
          %v1446 = vpack.c.b16 %v1350, %v1342
          %v1447 = vpack.c.b16 %v1351, %v1343
          %v1448 = vpack.c.b16 %v1360, %v1352
          %v1449 = vpack.c.b16 %v1361, %v1353
          %v1450 = vpack.c.b16 %v1362, %v1354
          %v1451 = vpack.c.b16 %v1363, %v1355
          %v1452 = vpack.c.b16 %v1364, %v1356
          %v1453 = vpack.c.b16 %v1365, %v1357
          %v1454 = vpack.c.b16 %v1366, %v1358
          %v1455 = vpack.c.b16 %v1367, %v1359
          %v1456 = vpack.c.b16 %v1376, %v1368
          %v1457 = vpack.c.b16 %v1377, %v1369
          %v1458 = vpack.c.b16 %v1378, %v1370
          %v1459 = vpack.c.b16 %v1379, %v1371
          %v1460 = vpack.c.b16 %v1380, %v1372
          %v1461 = vpack.c.b16 %v1381, %v1373
          %v1462 = vpack.c.b16 %v1382, %v1374
          %v1463 = vpack.c.b16 %v1383, %v1375
          %v1464 = vpack.c.b16 %v1392, %v1384
          %v1465 = vpack.c.b16 %v1393, %v1385
          %v1466 = vpack.c.b16 %v1394, %v1386
          %v1467 = vpack.c.b16 %v1395, %v1387
          %v1468 = vpack.c.b16 %v1396, %v1388
          %v1469 = vpack.c.b16 %v1397, %v1389
          %v1470 = vpack.c.b16 %v1398, %v1390
          %v1471 = vpack.c.b16 %v1399, %v1391
          %v1472 = vpack.c.b16 %v1408, %v1400
          %v1473 = vpack.c.b16 %v1409, %v1401
          %v1474 = vpack.c.b16 %v1410, %v1402
          %v1475 = vpack.c.b16 %v1411, %v1403
          %v1476 = vpack.c.b16 %v1412, %v1404
          %v1477 = vpack.c.b16 %v1413, %v1405
          %v1478 = vpack.c.b16 %v1414, %v1406
          %v1479 = vpack.c.b16 %v1415, %v1407
          %1544 = vmatprep.subr.bf16.mxu0 %v1417
          %1545 = vmatpush1.bf16.msra.mxu0 %v1416
          %1546 = vmatprep.subr.bf16.mxu0 %v1425
          %1547 = vmatpush1.bf16.msra.mxu0 %v1424
          %1548 = vmatprep.subr.bf16.mxu0 %v1433
          %1549 = vmatpush1.bf16.msra.mxu0 %v1432
          %1550 = vmatprep.subr.bf16.mxu0 %v1441
          %1551 = vmatpush1.bf16.msra.mxu0 %v1440
          %1552 = vmatprep.subr.bf16.mxu0 %v1449
          %1553 = vmatpush1.bf16.msra.mxu0 %v1448
          %1554 = vmatprep.subr.bf16.mxu0 %v1457
          %1555 = vmatpush1.bf16.msra.mxu0 %v1456
          %1556 = vmatprep.subr.bf16.mxu0 %v1465
          %1557 = vmatpush1.bf16.msra.mxu0 %v1464
          %1558 = vmatprep.subr.bf16.mxu0 %v1473
          %1559 = vmatpush1.bf16.msra.mxu0 %v1472
          %1560 = vmatprep.subr.bf16.mxu0 0
          %1561 = vmatpush1.bf16.msra.mxu0 0
          %1562 = vmatprep.subr.bf16.mxu0 0
          %1563 = vmatpush1.bf16.msra.mxu0 0
          %1564 = vmatprep.subr.bf16.mxu0 0
          %1565 = vmatpush1.bf16.msra.mxu0 0
          %1566 = vmatprep.subr.bf16.mxu0 0
          %1567 = vmatpush1.bf16.msra.mxu0 0
          %1568 = vmatprep.subr.bf16.mxu0 0
          %1569 = vmatpush1.bf16.msra.mxu0 0
          %1570 = vmatprep.subr.bf16.mxu0 0
          %1571 = vmatpush1.bf16.msra.mxu0 0
          %1572 = vmatprep.subr.bf16.mxu0 0
          %1573 = vmatpush1.bf16.msra.mxu0 0
          %1574 = vmatprep.subr.bf16.mxu0 0
          %1575 = vmatpush1.bf16.msra.mxu0 0
          %1576 = vmatprep.mubr.bf16.mxu0 0
          %1577 = vmatmul.mubr.bf16.gmra.mrb[0].mxu0 %v1117
          %v1578 = vpop.f32.mrb[0].mxu0
          %v1579 = vadd.f32 %v1187, %v1578
          %v1580 = vpop.f32.mrb[0].mxu0
          %v1581 = vadd.f32 %v1191, %v1580
          %v1582 = vpop.f32.mrb[0].mxu0
          %v1583 = vpop.f32.mrb[0].mxu0
          %1584 = vdwg.mxu0
          %1585 = vmatprep.subr.bf16.mxu0 %v1419
          %1586 = vmatpush1.bf16.msra.mxu0 %v1418
          %1587 = vmatprep.subr.bf16.mxu0 %v1427
          %1588 = vmatpush1.bf16.msra.mxu0 %v1426
          %1589 = vmatprep.subr.bf16.mxu0 %v1435
          %1590 = vmatpush1.bf16.msra.mxu0 %v1434
          %1591 = vmatprep.subr.bf16.mxu0 %v1443
          %1592 = vmatpush1.bf16.msra.mxu0 %v1442
          %1593 = vmatprep.subr.bf16.mxu0 %v1451
          %1594 = vmatpush1.bf16.msra.mxu0 %v1450
          %1595 = vmatprep.subr.bf16.mxu0 %v1459
          %1596 = vmatpush1.bf16.msra.mxu0 %v1458
          %1597 = vmatprep.subr.bf16.mxu0 %v1467
          %1598 = vmatpush1.bf16.msra.mxu0 %v1466
          %1599 = vmatprep.subr.bf16.mxu0 %v1475
          %1600 = vmatpush1.bf16.msra.mxu0 %v1474
          %1601 = vmatprep.subr.bf16.mxu0 0
          %1602 = vmatpush1.bf16.msra.mxu0 0
          %1603 = vmatprep.subr.bf16.mxu0 0
          %1604 = vmatpush1.bf16.msra.mxu0 0
          %1605 = vmatprep.subr.bf16.mxu0 0
          %1606 = vmatpush1.bf16.msra.mxu0 0
          %1607 = vmatprep.subr.bf16.mxu0 0
          %1608 = vmatpush1.bf16.msra.mxu0 0
          %1609 = vmatprep.subr.bf16.mxu0 0
          %1610 = vmatpush1.bf16.msra.mxu0 0
          %1611 = vmatprep.subr.bf16.mxu0 0
          %1612 = vmatpush1.bf16.msra.mxu0 0
          %1613 = vmatprep.subr.bf16.mxu0 0
          %1614 = vmatpush1.bf16.msra.mxu0 0
          %1615 = vmatprep.subr.bf16.mxu0 0
          %1616 = vmatpush1.bf16.msra.mxu0 0
          %1617 = vmatprep.mubr.bf16.mxu0 0
          %1618 = vmatmul.mubr.bf16.gmra.mrb[0].mxu0 %v1117
          %v1619 = vpop.f32.mrb[0].mxu0
          %v1620 = vadd.f32 %v1195, %v1619
          %v1621 = vpop.f32.mrb[0].mxu0
          %v1622 = vadd.f32 %v1199, %v1621
          %v1623 = vpop.f32.mrb[0].mxu0
          %v1624 = vpop.f32.mrb[0].mxu0
          %1625 = vdwg.mxu0
          %1626 = vmatprep.subr.bf16.mxu0 %v1421
          %1627 = vmatpush1.bf16.msra.mxu0 %v1420
          %1628 = vmatprep.subr.bf16.mxu0 %v1429
          %1629 = vmatpush1.bf16.msra.mxu0 %v1428
          %1630 = vmatprep.subr.bf16.mxu0 %v1437
          %1631 = vmatpush1.bf16.msra.mxu0 %v1436
          %1632 = vmatprep.subr.bf16.mxu0 %v1445
          %1633 = vmatpush1.bf16.msra.mxu0 %v1444
          %1634 = vmatprep.subr.bf16.mxu0 %v1453
          %1635 = vmatpush1.bf16.msra.mxu0 %v1452
          %1636 = vmatprep.subr.bf16.mxu0 %v1461
          %1637 = vmatpush1.bf16.msra.mxu0 %v1460
          %1638 = vmatprep.subr.bf16.mxu0 %v1469
          %1639 = vmatpush1.bf16.msra.mxu0 %v1468
          %1640 = vmatprep.subr.bf16.mxu0 %v1477
          %1641 = vmatpush1.bf16.msra.mxu0 %v1476
          %1642 = vmatprep.subr.bf16.mxu0 0
          %1643 = vmatpush1.bf16.msra.mxu0 0
          %1644 = vmatprep.subr.bf16.mxu0 0
          %1645 = vmatpush1.bf16.msra.mxu0 0
          %1646 = vmatprep.subr.bf16.mxu0 0
          %1647 = vmatpush1.bf16.msra.mxu0 0
          %1648 = vmatprep.subr.bf16.mxu0 0
          %1649 = vmatpush1.bf16.msra.mxu0 0
          %1650 = vmatprep.subr.bf16.mxu0 0
          %1651 = vmatpush1.bf16.msra.mxu0 0
          %1652 = vmatprep.subr.bf16.mxu0 0
          %1653 = vmatpush1.bf16.msra.mxu0 0
          %1654 = vmatprep.subr.bf16.mxu0 0
          %1655 = vmatpush1.bf16.msra.mxu0 0
          %1656 = vmatprep.subr.bf16.mxu0 0
          %1657 = vmatpush1.bf16.msra.mxu0 0
          %1658 = vmatprep.mubr.bf16.mxu0 0
          %1659 = vmatmul.mubr.bf16.gmra.mrb[0].mxu0 %v1117
          %v1660 = vpop.f32.mrb[0].mxu0
          %v1661 = vadd.f32 %v1203, %v1660
          %v1662 = vpop.f32.mrb[0].mxu0
          %v1663 = vadd.f32 %v1207, %v1662
          %v1664 = vpop.f32.mrb[0].mxu0
          %v1665 = vpop.f32.mrb[0].mxu0
          %1666 = vdwg.mxu0
          %1667 = vmatprep.subr.bf16.mxu0 %v1423
          %1668 = vmatpush1.bf16.msra.mxu0 %v1422
          %1669 = vmatprep.subr.bf16.mxu0 %v1431
          %1670 = vmatpush1.bf16.msra.mxu0 %v1430
          %1671 = vmatprep.subr.bf16.mxu0 %v1439
          %1672 = vmatpush1.bf16.msra.mxu0 %v1438
          %1673 = vmatprep.subr.bf16.mxu0 %v1447
          %1674 = vmatpush1.bf16.msra.mxu0 %v1446
          %1675 = vmatprep.subr.bf16.mxu0 %v1455
          %1676 = vmatpush1.bf16.msra.mxu0 %v1454
          %1677 = vmatprep.subr.bf16.mxu0 %v1463
          %1678 = vmatpush1.bf16.msra.mxu0 %v1462
          %1679 = vmatprep.subr.bf16.mxu0 %v1471
          %1680 = vmatpush1.bf16.msra.mxu0 %v1470
          %1681 = vmatprep.subr.bf16.mxu0 %v1479
          %1682 = vmatpush1.bf16.msra.mxu0 %v1478
          %1683 = vmatprep.subr.bf16.mxu0 0
          %1684 = vmatpush1.bf16.msra.mxu0 0
          %1685 = vmatprep.subr.bf16.mxu0 0
          %1686 = vmatpush1.bf16.msra.mxu0 0
          %1687 = vmatprep.subr.bf16.mxu0 0
          %1688 = vmatpush1.bf16.msra.mxu0 0
          %1689 = vmatprep.subr.bf16.mxu0 0
          %1690 = vmatpush1.bf16.msra.mxu0 0
          %1691 = vmatprep.subr.bf16.mxu0 0
          %1692 = vmatpush1.bf16.msra.mxu0 0
          %1693 = vmatprep.subr.bf16.mxu0 0
          %1694 = vmatpush1.bf16.msra.mxu0 0
          %1695 = vmatprep.subr.bf16.mxu0 0
          %1696 = vmatpush1.bf16.msra.mxu0 0
          %1697 = vmatprep.subr.bf16.mxu0 0
          %1698 = vmatpush1.bf16.msra.mxu0 0
          %1699 = vmatprep.mubr.bf16.mxu0 0
          %1700 = vmatmul.mubr.bf16.gmra.mrb[0].mxu0 %v1117
          %v1701 = vpop.f32.mrb[0].mxu0
          %v1702 = vadd.f32 %v1211, %v1701
          %v1703 = vpop.f32.mrb[0].mxu0
          %v1704 = vadd.f32 %v1215, %v1703
          %v1705 = vpop.f32.mrb[0].mxu0
          %v1706 = vpop.f32.mrb[0].mxu0
          %1707 = vdwg.mxu0
          %v1712 = vcombine.low %v1579, %v1581
          %v1713 = vcombine.low %v1620, %v1622
          %v1715 = vunpack.c.l.s4 1983009808
          %v1716 = vunpack.c.0.s8 %v1715
          %v1717 = vlaneseq
          %v1718 = vshrl.u32 %v1717, 7
          %v1719 = vsub.s32 %v1716, %v1718
          %v1720 = vrot.slane %v1712, %v1719
          %v1722 = vunpack.c.l.s4 1983009808
          %v1723 = vunpack.c.0.s8 %v1722
          %v1724 = vlaneseq
          %v1725 = vshrl.u32 %v1724, 7
          %v1726 = vsub.s32 %v1723, %v1725
          %v1727 = vrot.slane %v1713, %v1726
          %v1728 = vcombine.low %v1720, %v1727
          %1730 = vst [vmem:[%s7] sm:$0xff] %v1728
          %v1731 = vmul.f32 %v1661, %v1661
          %v1732 = vmul.f32 %v1663, %v1663
          %v1733 = vmul.f32 %v1702, %v1702
          %v1734 = vmul.f32 %v1704, %v1704
          %vm1735 = vcmask 1041408
          %v1736 = vsel %vm1735, %v1731, 0.0
          %v1737 = vsel %vm1735, %v1732, 0.0
          %v1738 = vadd.f32 %v1736, %v1737
          %v1739 = vsel %vm1735, %v1733, 0.0
          %v1740 = vadd.f32 %v1738, %v1739
          %v1741 = vsel %vm1735, %v1734, 0.0
          %v1742 = vadd.f32 %v1740, %v1741
          %1743 = vadd.xlane.f32.xlu0 %v1742
          %v1744 = vpop.xlane.xlu0 %1743
          %v1745 = vmax.f32 %v1744, 1e-24
          %v1746 = vrsqrt.pop %v1745
          %v1747 = vmul.f32 %v1661, %v1746
          %v1748 = vmul.f32 %v1663, %v1746
          %v1749 = vmul.f32 %v1702, %v1746
          %v1750 = vmul.f32 %v1704, %v1746
          %v1751 = vpack.c.bf16 %v1747, %v1747
          %v1752 = vpack.c.bf16 %v1748, %v1748
          %v1753 = vpack.c.bf16 %v1749, %v1749
          %v1754 = vpack.c.bf16 %v1750, %v1750
          %v1759 = vcombine.low %v1751, %v1752
          %v1760 = vcombine.low %v1753, %v1754
          %v1762 = vunpack.c.l.s4 1966171168
          %v1763 = vunpack.c.0.s8 %v1762
          %v1764 = vlaneseq
          %v1765 = vshrl.u32 %v1764, 7
          %v1766 = vsub.s32 %v1763, %v1765
          %v1767 = vrot.slane %v1759, %v1766
          %v1769 = vunpack.c.l.s4 1966171168
          %v1770 = vunpack.c.0.s8 %v1769
          %v1771 = vlaneseq
          %v1772 = vshrl.u32 %v1771, 7
          %v1773 = vsub.s32 %v1770, %v1772
          %v1774 = vrot.slane %v1760, %v1773
          %v1775 = vcombine.low %v1767, %v1774
          %v1777 = vunpack.c.l.s4 1966171168
          %v1778 = vunpack.c.0.s8 %v1777
          %v1779 = vlaneseq
          %v1780 = vshrl.u32 %v1779, 7
          %v1781 = vsub.s32 %v1778, %v1780
          %v1782 = vrot.slane %v1775, %v1781
          %1784 = vst [vmem:[#allocation2] sm:$0xf] %v1782
        $region72: #{multi_head_forward.1} parent=47 // pred_fallthru
          _
        %v1785 = vld [vmem:[#allocation2] sm:$0xf]
        %v1786 = vld [vmem:[%s338] sm:$0xff]
        %v1787 = vld [vmem:[%s338 + $0x8] sm:$0xff]
        %v1788 = vld [vmem:[%s338 + $0x10] sm:$0xff]
        %v1789 = vld [vmem:[%s338 + $0x18] sm:$0xff]
        %v1790 = vld [vmem:[%s338 + $0x20] sm:$0xff]
        %v1791 = vld [vmem:[%s338 + $0x28] sm:$0xff]
        %v1792 = vld [vmem:[%s338 + $0x30] sm:$0xff]
        %v1793 = vld [vmem:[%s338 + $0x38] sm:$0xff]
        %v1794 = vld [vmem:[%s338 + $0x40] sm:$0xff]
        %v1795 = vld [vmem:[%s338 + $0x48] sm:$0xff]
        %v1796 = vld [vmem:[%s338 + $0x50] sm:$0xff]
        %v1797 = vld [vmem:[%s338 + $0x58] sm:$0xff]
        %v1798 = vld [vmem:[%s338 + $0x60] sm:$0xff]
        %v1799 = vld [vmem:[%s338 + $0x68] sm:$0xff]
        %v1800 = vld [vmem:[%s338 + $0x70] sm:$0xff]
        %v1801 = vld [vmem:[%s338 + $0x78] sm:$0xff]
        %v1802 = vld [vmem:[%s338 + $0x80] sm:$0xff]
        %v1803 = vld [vmem:[%s338 + $0x88] sm:$0xff]
        %v1804 = vld [vmem:[%s338 + $0x90] sm:$0xff]
        %v1805 = vld [vmem:[%s338 + $0x98] sm:$0xff]
        %v1806 = vld [vmem:[%s338 + $0xa0] sm:$0xff]
        %v1807 = vld [vmem:[%s338 + $0xa8] sm:$0xff]
        %v1808 = vld [vmem:[%s338 + $0xb0] sm:$0xff]
        %v1809 = vld [vmem:[%s338 + $0xb8] sm:$0xff]
        %v1810 = vld [vmem:[%s338 + $0xc0] sm:$0xff]
        %v1811 = vld [vmem:[%s338 + $0xc8] sm:$0xff]
        %v1812 = vld [vmem:[%s338 + $0xd0] sm:$0xff]
        %v1813 = vld [vmem:[%s338 + $0xd8] sm:$0xff]
        %v1814 = vld [vmem:[%s338 + $0xe0] sm:$0xff]
        %v1815 = vld [vmem:[%s338 + $0xe8] sm:$0xff]
        %v1816 = vld [vmem:[%s338 + $0xf0] sm:$0xff]
        %v1817 = vld [vmem:[%s338 + $0xf8] sm:$0xff]
        %v1818 = vld [vmem:[%s338 + $0x100] sm:$0xff]
        %v1819 = vld [vmem:[%s338 + $0x108] sm:$0xff]
        %v1820 = vld [vmem:[%s338 + $0x110] sm:$0xff]
        %v1821 = vld [vmem:[%s338 + $0x118] sm:$0xff]
        %v1822 = vld [vmem:[%s338 + $0x120] sm:$0xff]
        %v1823 = vld [vmem:[%s338 + $0x128] sm:$0xff]
        %v1824 = vld [vmem:[%s338 + $0x130] sm:$0xff]
        %v1825 = vld [vmem:[%s338 + $0x138] sm:$0xff]
        %v1826 = vld [vmem:[%s338 + $0x140] sm:$0xff]
        %v1827 = vld [vmem:[%s338 + $0x148] sm:$0xff]
        %v1828 = vld [vmem:[%s338 + $0x150] sm:$0xff]
        %v1829 = vld [vmem:[%s338 + $0x158] sm:$0xff]
        %v1830 = vld [vmem:[%s338 + $0x160] sm:$0xff]
        %v1831 = vld [vmem:[%s338 + $0x168] sm:$0xff]
        %v1832 = vld [vmem:[%s338 + $0x170] sm:$0xff]
        %v1833 = vld [vmem:[%s338 + $0x178] sm:$0xff]
        %v1834 = vld [vmem:[%s338 + $0x180] sm:$0xff]
        %v1835 = vld [vmem:[%s338 + $0x188] sm:$0xff]
        %v1836 = vld [vmem:[%s338 + $0x190] sm:$0xff]
        %v1837 = vld [vmem:[%s338 + $0x198] sm:$0xff]
        %v1838 = vld [vmem:[%s338 + $0x1a0] sm:$0xff]
        %v1839 = vld [vmem:[%s338 + $0x1a8] sm:$0xff]
        %v1840 = vld [vmem:[%s338 + $0x1b0] sm:$0xff]
        %v1841 = vld [vmem:[%s338 + $0x1b8] sm:$0xff]
        %v1842 = vld [vmem:[%s338 + $0x1c0] sm:$0xff]
        %v1843 = vld [vmem:[%s338 + $0x1c8] sm:$0xff]
        %v1844 = vld [vmem:[%s338 + $0x1d0] sm:$0xff]
        %v1845 = vld [vmem:[%s338 + $0x1d8] sm:$0xff]
        %v1846 = vld [vmem:[%s338 + $0x1e0] sm:$0xff]
        %v1847 = vld [vmem:[%s338 + $0x1e8] sm:$0xff]
        %v1848 = vld [vmem:[%s338 + $0x1f0] sm:$0xff]
        %v1849 = vld [vmem:[%s338 + $0x1f8] sm:$0xff]
        %v1852 = vunpack.c.l.s4 1966171168
        %v1853 = vunpack.c.0.s8 %v1852
        %v1854 = vlaneseq
        %v1855 = vshrl.u32 %v1854, 7
        %v1856 = vsub.s32 %v1853, %v1855
        %v1857 = vrot.slane %v1785, %v1856
        %v1858 = vcombine.high %v1857, %v1857
        %v1860 = vunpack.c.l.s4 1966171168
        %v1861 = vunpack.c.0.s8 %v1860
        %v1862 = vlaneseq
        %v1863 = vshrl.u32 %v1862, 7
        %v1864 = vsub.s32 %v1861, %v1863
        %v1865 = vrot.slane %v1857, %v1864
        %v1867 = vunpack.c.l.s4 1966171168
        %v1868 = vunpack.c.0.s8 %v1867
        %v1869 = vlaneseq
        %v1870 = vshrl.u32 %v1869, 7
        %v1871 = vsub.s32 %v1868, %v1870
        %v1872 = vrot.slane %v1858, %v1871
        %v1873 = vcombine.high %v1865, %v1865
        %v1874 = vcombine.high %v1872, %v1872
        %v1943 = vunpack.c.l.b16 %v1786
        %v1944 = vunpack.c.h.b16 %v1786
        %v1945 = vunpack.c.l.b16 %v1787
        %v1946 = vunpack.c.h.b16 %v1787
        %v1947 = vunpack.c.l.b16 %v1788
        %v1948 = vunpack.c.h.b16 %v1788
        %v1949 = vunpack.c.l.b16 %v1789
        %v1950 = vunpack.c.h.b16 %v1789
        %v1951 = vunpack.c.l.b16 %v1790
        %v1952 = vunpack.c.h.b16 %v1790
        %v1953 = vunpack.c.l.b16 %v1791
        %v1954 = vunpack.c.h.b16 %v1791
        %v1955 = vunpack.c.l.b16 %v1792
        %v1956 = vunpack.c.h.b16 %v1792
        %v1957 = vunpack.c.l.b16 %v1793
        %v1958 = vunpack.c.h.b16 %v1793
        %v1959 = vunpack.c.l.b16 %v1794
        %v1960 = vunpack.c.h.b16 %v1794
        %v1961 = vunpack.c.l.b16 %v1795
        %v1962 = vunpack.c.h.b16 %v1795
        %v1963 = vunpack.c.l.b16 %v1796
        %v1964 = vunpack.c.h.b16 %v1796
        %v1965 = vunpack.c.l.b16 %v1797
        %v1966 = vunpack.c.h.b16 %v1797
        %v1967 = vunpack.c.l.b16 %v1798
        %v1968 = vunpack.c.h.b16 %v1798
        %v1969 = vunpack.c.l.b16 %v1799
        %v1970 = vunpack.c.h.b16 %v1799
        %v1971 = vunpack.c.l.b16 %v1800
        %v1972 = vunpack.c.h.b16 %v1800
        %v1973 = vunpack.c.l.b16 %v1801
        %v1974 = vunpack.c.h.b16 %v1801
        %v1975 = vunpack.c.l.b16 %v1802
        %v1976 = vunpack.c.h.b16 %v1802
        %v1977 = vunpack.c.l.b16 %v1803
        %v1978 = vunpack.c.h.b16 %v1803
        %v1979 = vunpack.c.l.b16 %v1804
        %v1980 = vunpack.c.h.b16 %v1804
        %v1981 = vunpack.c.l.b16 %v1805
        %v1982 = vunpack.c.h.b16 %v1805
        %v1983 = vunpack.c.l.b16 %v1806
        %v1984 = vunpack.c.h.b16 %v1806
        %v1985 = vunpack.c.l.b16 %v1807
        %v1986 = vunpack.c.h.b16 %v1807
        %v1987 = vunpack.c.l.b16 %v1808
        %v1988 = vunpack.c.h.b16 %v1808
        %v1989 = vunpack.c.l.b16 %v1809
        %v1990 = vunpack.c.h.b16 %v1809
        %v1991 = vunpack.c.l.b16 %v1810
        %v1992 = vunpack.c.h.b16 %v1810
        %v1993 = vunpack.c.l.b16 %v1811
        %v1994 = vunpack.c.h.b16 %v1811
        %v1995 = vunpack.c.l.b16 %v1812
        %v1996 = vunpack.c.h.b16 %v1812
        %v1997 = vunpack.c.l.b16 %v1813
        %v1998 = vunpack.c.h.b16 %v1813
        %v1999 = vunpack.c.l.b16 %v1814
        %v2000 = vunpack.c.h.b16 %v1814
        %v2001 = vunpack.c.l.b16 %v1815
        %v2002 = vunpack.c.h.b16 %v1815
        %v2003 = vunpack.c.l.b16 %v1816
        %v2004 = vunpack.c.h.b16 %v1816
        %v2005 = vunpack.c.l.b16 %v1817
        %v2006 = vunpack.c.h.b16 %v1817
        %v2007 = vunpack.c.l.b16 %v1818
        %v2008 = vunpack.c.h.b16 %v1818
        %v2009 = vunpack.c.l.b16 %v1819
        %v2010 = vunpack.c.h.b16 %v1819
        %v2011 = vunpack.c.l.b16 %v1820
        %v2012 = vunpack.c.h.b16 %v1820
        %v2013 = vunpack.c.l.b16 %v1821
        %v2014 = vunpack.c.h.b16 %v1821
        %v2015 = vunpack.c.l.b16 %v1822
        %v2016 = vunpack.c.h.b16 %v1822
        %v2017 = vunpack.c.l.b16 %v1823
        %v2018 = vunpack.c.h.b16 %v1823
        %v2019 = vunpack.c.l.b16 %v1824
        %v2020 = vunpack.c.h.b16 %v1824
        %v2021 = vunpack.c.l.b16 %v1825
        %v2022 = vunpack.c.h.b16 %v1825
        %v2023 = vunpack.c.l.b16 %v1826
        %v2024 = vunpack.c.h.b16 %v1826
        %v2025 = vunpack.c.l.b16 %v1827
        %v2026 = vunpack.c.h.b16 %v1827
        %v2027 = vunpack.c.l.b16 %v1828
        %v2028 = vunpack.c.h.b16 %v1828
        %v2029 = vunpack.c.l.b16 %v1829
        %v2030 = vunpack.c.h.b16 %v1829
        %v2031 = vunpack.c.l.b16 %v1830
        %v2032 = vunpack.c.h.b16 %v1830
        %v2033 = vunpack.c.l.b16 %v1831
        %v2034 = vunpack.c.h.b16 %v1831
        %v2035 = vunpack.c.l.b16 %v1832
        %v2036 = vunpack.c.h.b16 %v1832
        %v2037 = vunpack.c.l.b16 %v1833
        %v2038 = vunpack.c.h.b16 %v1833
        %v2039 = vunpack.c.l.b16 %v1834
        %v2040 = vunpack.c.h.b16 %v1834
        %v2041 = vunpack.c.l.b16 %v1835
        %v2042 = vunpack.c.h.b16 %v1835
        %v2043 = vunpack.c.l.b16 %v1836
        %v2044 = vunpack.c.h.b16 %v1836
        %v2045 = vunpack.c.l.b16 %v1837
        %v2046 = vunpack.c.h.b16 %v1837
        %v2047 = vunpack.c.l.b16 %v1838
        %v2048 = vunpack.c.h.b16 %v1838
        %v2049 = vunpack.c.l.b16 %v1839
        %v2050 = vunpack.c.h.b16 %v1839
        %v2051 = vunpack.c.l.b16 %v1840
        %v2052 = vunpack.c.h.b16 %v1840
        %v2053 = vunpack.c.l.b16 %v1841
        %v2054 = vunpack.c.h.b16 %v1841
        %v2055 = vunpack.c.l.b16 %v1842
        %v2056 = vunpack.c.h.b16 %v1842
        %v2057 = vunpack.c.l.b16 %v1843
        %v2058 = vunpack.c.h.b16 %v1843
        %v2059 = vunpack.c.l.b16 %v1844
        %v2060 = vunpack.c.h.b16 %v1844
        %v2061 = vunpack.c.l.b16 %v1845
        %v2062 = vunpack.c.h.b16 %v1845
        %v2063 = vunpack.c.l.b16 %v1846
        %v2064 = vunpack.c.h.b16 %v1846
        %v2065 = vunpack.c.l.b16 %v1847
        %v2066 = vunpack.c.h.b16 %v1847
        %v2067 = vunpack.c.l.b16 %v1848
        %v2068 = vunpack.c.h.b16 %v1848
        %v2069 = vunpack.c.l.b16 %v1849
        %v2070 = vunpack.c.h.b16 %v1849
        %v2071 = vpack.c.b16 %v1945, %v1943
        %v2072 = vpack.c.b16 %v1946, %v1944
        %v2073 = vpack.c.b16 %v1949, %v1947
        %v2074 = vpack.c.b16 %v1950, %v1948
        %v2075 = vpack.c.b16 %v1953, %v1951
        %v2076 = vpack.c.b16 %v1954, %v1952
        %v2077 = vpack.c.b16 %v1957, %v1955
        %v2078 = vpack.c.b16 %v1958, %v1956
        %v2079 = vpack.c.b16 %v1961, %v1959
        %v2080 = vpack.c.b16 %v1962, %v1960
        %v2081 = vpack.c.b16 %v1965, %v1963
        %v2082 = vpack.c.b16 %v1966, %v1964
        %v2083 = vpack.c.b16 %v1969, %v1967
        %v2084 = vpack.c.b16 %v1970, %v1968
        %v2085 = vpack.c.b16 %v1973, %v1971
        %v2086 = vpack.c.b16 %v1974, %v1972
        %v2087 = vpack.c.b16 %v1977, %v1975
        %v2088 = vpack.c.b16 %v1978, %v1976
        %v2089 = vpack.c.b16 %v1981, %v1979
        %v2090 = vpack.c.b16 %v1982, %v1980
        %v2091 = vpack.c.b16 %v1985, %v1983
        %v2092 = vpack.c.b16 %v1986, %v1984
        %v2093 = vpack.c.b16 %v1989, %v1987
        %v2094 = vpack.c.b16 %v1990, %v1988
        %v2095 = vpack.c.b16 %v1993, %v1991
        %v2096 = vpack.c.b16 %v1994, %v1992
        %v2097 = vpack.c.b16 %v1997, %v1995
        %v2098 = vpack.c.b16 %v1998, %v1996
        %v2099 = vpack.c.b16 %v2001, %v1999
        %v2100 = vpack.c.b16 %v2002, %v2000
        %v2101 = vpack.c.b16 %v2005, %v2003
        %v2102 = vpack.c.b16 %v2006, %v2004
        %v2103 = vpack.c.b16 %v2009, %v2007
        %v2104 = vpack.c.b16 %v2010, %v2008
        %v2105 = vpack.c.b16 %v2013, %v2011
        %v2106 = vpack.c.b16 %v2014, %v2012
        %v2107 = vpack.c.b16 %v2017, %v2015
        %v2108 = vpack.c.b16 %v2018, %v2016
        %v2109 = vpack.c.b16 %v2021, %v2019
        %v2110 = vpack.c.b16 %v2022, %v2020
        %v2111 = vpack.c.b16 %v2025, %v2023
        %v2112 = vpack.c.b16 %v2026, %v2024
        %v2113 = vpack.c.b16 %v2029, %v2027
        %v2114 = vpack.c.b16 %v2030, %v2028
        %v2115 = vpack.c.b16 %v2033, %v2031
        %v2116 = vpack.c.b16 %v2034, %v2032
        %v2117 = vpack.c.b16 %v2037, %v2035
        %v2118 = vpack.c.b16 %v2038, %v2036
        %v2119 = vpack.c.b16 %v2041, %v2039
        %v2120 = vpack.c.b16 %v2042, %v2040
        %v2121 = vpack.c.b16 %v2045, %v2043
        %v2122 = vpack.c.b16 %v2046, %v2044
        %v2123 = vpack.c.b16 %v2049, %v2047
        %v2124 = vpack.c.b16 %v2050, %v2048
        %v2125 = vpack.c.b16 %v2053, %v2051
        %v2126 = vpack.c.b16 %v2054, %v2052
        %v2127 = vpack.c.b16 %v2057, %v2055
        %v2128 = vpack.c.b16 %v2058, %v2056
        %v2129 = vpack.c.b16 %v2061, %v2059
        %v2130 = vpack.c.b16 %v2062, %v2060
        %v2131 = vpack.c.b16 %v2065, %v2063
        %v2132 = vpack.c.b16 %v2066, %v2064
        %v2133 = vpack.c.b16 %v2069, %v2067
        %v2134 = vpack.c.b16 %v2070, %v2068
        %2199 = vmatprep.subr.bf16.mxu0 %v2072
        %2200 = vmatpush1.bf16.msra.mxu0 %v2071
        %2201 = vmatprep.subr.bf16.mxu0 %v2074
        %2202 = vmatpush1.bf16.msra.mxu0 %v2073
        %2203 = vmatprep.subr.bf16.mxu0 %v2076
        %2204 = vmatpush1.bf16.msra.mxu0 %v2075
        %2205 = vmatprep.subr.bf16.mxu0 %v2078
        %2206 = vmatpush1.bf16.msra.mxu0 %v2077
        %2207 = vmatprep.subr.bf16.mxu0 %v2080
        %2208 = vmatpush1.bf16.msra.mxu0 %v2079
        %2209 = vmatprep.subr.bf16.mxu0 %v2082
        %2210 = vmatpush1.bf16.msra.mxu0 %v2081
        %2211 = vmatprep.subr.bf16.mxu0 %v2084
        %2212 = vmatpush1.bf16.msra.mxu0 %v2083
        %2213 = vmatprep.subr.bf16.mxu0 %v2086
        %2214 = vmatpush1.bf16.msra.mxu0 %v2085
        %2215 = vmatprep.subr.bf16.mxu0 %v2088
        %2216 = vmatpush1.bf16.msra.mxu0 %v2087
        %2217 = vmatprep.subr.bf16.mxu0 %v2090
        %2218 = vmatpush1.bf16.msra.mxu0 %v2089
        %2219 = vmatprep.subr.bf16.mxu0 %v2092
        %2220 = vmatpush1.bf16.msra.mxu0 %v2091
        %2221 = vmatprep.subr.bf16.mxu0 %v2094
        %2222 = vmatpush1.bf16.msra.mxu0 %v2093
        %2223 = vmatprep.subr.bf16.mxu0 %v2096
        %2224 = vmatpush1.bf16.msra.mxu0 %v2095
        %2225 = vmatprep.subr.bf16.mxu0 %v2098
        %2226 = vmatpush1.bf16.msra.mxu0 %v2097
        %2227 = vmatprep.subr.bf16.mxu0 %v2100
        %2228 = vmatpush1.bf16.msra.mxu0 %v2099
        %2229 = vmatprep.subr.bf16.mxu0 %v2102
        %2230 = vmatpush1.bf16.msra.mxu0 %v2101
        %2231 = vmatprep.mubr.bf16.mxu0 %v1872
        %2232 = vmatmul.mubr.bf16.gmra.mrb[0].mxu0 %v1865
        %v2233 = vpop.f32.mrb[0].mxu0
        %v2234 = vadd.f32 0.0, %v2233
        %v2235 = vpop.f32.mrb[0].mxu0
        %v2236 = vadd.f32 0.0, %v2235
        %v2237 = vpop.f32.mrb[0].mxu0
        %v2238 = vpop.f32.mrb[0].mxu0
        %2239 = vdwg.mxu0
        %2240 = vmatprep.subr.bf16.mxu0 %v2104
        %2241 = vmatpush1.bf16.msra.mxu0 %v2103
        %2242 = vmatprep.subr.bf16.mxu0 %v2106
        %2243 = vmatpush1.bf16.msra.mxu0 %v2105
        %2244 = vmatprep.subr.bf16.mxu0 %v2108
        %2245 = vmatpush1.bf16.msra.mxu0 %v2107
        %2246 = vmatprep.subr.bf16.mxu0 %v2110
        %2247 = vmatpush1.bf16.msra.mxu0 %v2109
        %2248 = vmatprep.subr.bf16.mxu0 %v2112
        %2249 = vmatpush1.bf16.msra.mxu0 %v2111
        %2250 = vmatprep.subr.bf16.mxu0 %v2114
        %2251 = vmatpush1.bf16.msra.mxu0 %v2113
        %2252 = vmatprep.subr.bf16.mxu0 %v2116
        %2253 = vmatpush1.bf16.msra.mxu0 %v2115
        %2254 = vmatprep.subr.bf16.mxu0 %v2118
        %2255 = vmatpush1.bf16.msra.mxu0 %v2117
        %2256 = vmatprep.subr.bf16.mxu0 %v2120
        %2257 = vmatpush1.bf16.msra.mxu0 %v2119
        %2258 = vmatprep.subr.bf16.mxu0 %v2122
        %2259 = vmatpush1.bf16.msra.mxu0 %v2121
        %2260 = vmatprep.subr.bf16.mxu0 %v2124
        %2261 = vmatpush1.bf16.msra.mxu0 %v2123
        %2262 = vmatprep.subr.bf16.mxu0 %v2126
        %2263 = vmatpush1.bf16.msra.mxu0 %v2125
        %2264 = vmatprep.subr.bf16.mxu0 %v2128
        %2265 = vmatpush1.bf16.msra.mxu0 %v2127
        %2266 = vmatprep.subr.bf16.mxu0 %v2130
        %2267 = vmatpush1.bf16.msra.mxu0 %v2129
        %2268 = vmatprep.subr.bf16.mxu0 %v2132
        %2269 = vmatpush1.bf16.msra.mxu0 %v2131
        %2270 = vmatprep.subr.bf16.mxu0 %v2134
        %2271 = vmatpush1.bf16.msra.mxu0 %v2133
        %2272 = vmatprep.mubr.bf16.mxu0 %v1874
        %2273 = vmatmul.mubr.bf16.gmra.mrb[0].mxu0 %v1873
        %v2274 = vpop.f32.mrb[0].mxu0
        %v2275 = vadd.f32 %v2234, %v2274
        %v2276 = vpop.f32.mrb[0].mxu0
        %v2277 = vadd.f32 %v2236, %v2276
        %v2278 = vpop.f32.mrb[0].mxu0
        %v2279 = vpop.f32.mrb[0].mxu0
        %2280 = vdwg.mxu0
        %v2281 = vmax.f32 %v2275, -1.0
        %v2282 = vmax.f32 %v2277, -1.0
        %v2283 = vmin.f32 %v2281, 1.0
        %v2284 = vmin.f32 %v2282, 1.0
        %v2285 = vmul.f32 %v2283, %v2283
        %v2286 = vmul.f32 %v2284, %v2284
        %v2287 = vsub.f32 1.0, %v2285
        %v2288 = vsub.f32 1.0, %v2286
        %v2289 = vmax.f32 %v2287, 0.0
        %v2290 = vmax.f32 %v2288, 0.0
        %v2291 = vrsqrt.pop %v2289
        %v2292 = vmul.f32 %v2289, %v2291
        %vm2293 = vcmp.eq.f32.partialorder %v2289, inf
        %v2294 = vsel %vm2293, %v2289, %v2292
        %vm2295 = vcmp.eq.f32.partialorder %v2289, 0.0
        %v2296 = vand.u32 %v2289, 2147483648
        %v2297 = vsel %vm2295, %v2296, %v2294
        %v2298 = vrsqrt.pop %v2290
        %v2299 = vmul.f32 %v2290, %v2298
        %vm2300 = vcmp.eq.f32.partialorder %v2290, inf
        %v2301 = vsel %vm2300, %v2290, %v2299
        %vm2302 = vcmp.eq.f32.partialorder %v2290, 0.0
        %v2303 = vand.u32 %v2290, 2147483648
        %v2304 = vsel %vm2302, %v2303, %v2301
        %v2305 = vmul.f32 %v2283, 0.87758255
        %v2306 = vmul.f32 %v2284, 0.87758255
        %v2307 = vmul.f32 %v2297, 0.47942555
        %v2308 = vmul.f32 %v2304, 0.47942555
        %v2309 = vsub.f32 %v2305, %v2307
        %v2310 = vsub.f32 %v2306, %v2308
        %v2311 = vsub.f32 %v2283, -0.87758255
        %v2312 = vsub.f32 %v2284, -0.87758255
        %vm2313 = vcmp.le.f32.partialorder %v2311, 0.0
        %vm2314 = vcmp.le.f32.partialorder %v2312, 0.0
        %v2315 = vsub.f32 %v2283, 0.23971277
        %v2316 = vsub.f32 %v2284, 0.23971277
        %v2317 = vsel %vm2313, %v2315, %v2309
        %v2318 = vsel %vm2314, %v2316, %v2310
        %v2319 = vlaneseq
        %v2320 = vand.u32 %v2319, 127
        %v2321 = vadd.s32 %v2320, 128
        %s2322 = smul.u32 %s23, 256
        %v2323 = vstv %s2322
        %v2324 = vadd.s32 %v2320, %v2323
        %v2325 = vadd.s32 %v2321, %v2323
        %v2326 = vld [vmem:[%s1] sm:$0x3]
        %2327 = vset.pattern.permute.xlu0 0
        %2328 = vperm.xlu0 %2327, %v2326
        %v2329 = vpop.permute.xlu0 %2328
        %vm2330 = vcmp.eq.s32.totalorder %v2324, %v2329
        %vm2331 = vcmp.eq.s32.totalorder %v2325, %v2329
        %v2332 = vsel %vm2330, %v2317, %v2283
        %v2333 = vsel %vm2331, %v2318, %v2284
        %v2334 = vmul.f32 %v2332, 32.0
        %v2335 = vmul.f32 %v2333, 32.0
        %v2338 = vcombine.low %v2334, %v2335
        %v2340 = vunpack.c.l.s4 1983009808
        %v2341 = vunpack.c.0.s8 %v2340
        %v2342 = vlaneseq
        %v2343 = vshrl.u32 %v2342, 7
        %v2344 = vsub.s32 %v2341, %v2343
        %v2345 = vrot.slane %v2338, %v2344
        %2347 = vst [vmem:[%s376] sm:$0xf] %v2345
        %s2348 = smul.u32 2, %s23
        %p2349 = scmp.lt.s32.totalorder %s2348, 11
        %s2350 = scalar_select %p2349, %s2348, 11
        %s2351 = smul.addr %s2350, 2
        %s2352 = scalar_lea.vmem %s8, %s2351
        // Predicated region
        $region73: #{multi_head_forward.1} parent=47 // pred_check
          %p2353 = pneg %p188
        $region74: #{multi_head_forward.1} parent=47 // pred_check_branch
          %2355 = sbr.rel (%p2353) target = $region76
        $region75: #{multi_head_forward.1} parent=47 // pred_region
          _
        $region76: #{multi_head_forward.1} parent=47 // pred_fallthru
          _
        // Predicated region
        $region77: #{multi_head_forward.1} parent=47 // pred_check
          %p2356 = pneg %p214
        $region78: #{multi_head_forward.1} parent=47 // pred_check_branch
          %2358 = sbr.rel (%p2356) target = $region80
        $region79: #{multi_head_forward.1} parent=47 // pred_region
          %s2359 = smul.u32 2, %s23
        $region80: #{multi_head_forward.1} parent=47 // pred_fallthru
          _
        // Predicated region
        $region81: #{multi_head_forward.1} parent=47 // pred_check
          %p2360 = pneg %p188
        $region82: #{multi_head_forward.1} parent=47 // pred_check_branch
          %2362 = sbr.rel (%p2360) target = $region84
        $region83: #{multi_head_forward.1} parent=47 // pred_region
          _
        $region84: #{multi_head_forward.1} parent=47 // pred_fallthru
          _
      $region48: #{multi_head_forward.1} parent=5 // pred_fallthru
        _
      %p2363 = scmp.le.s32.totalorder 2, %s18
      // Predicated region
      $region85: #{multi_head_forward.1} parent=5 // pred_check
        %p2364 = pneg %p2363
      $region86: #{multi_head_forward.1} parent=5 // pred_check_branch
        %2366 = sbr.rel (%p2364) target = $region88
      $region87: #{multi_head_forward.1} parent=5 // pred_region
        %s2367 = ssub.s32 %s18, 2
        // Predicated region
        $region89: #{multi_head_forward.1} parent=87 // pred_check
          %p2368 = pneg %p220
        $region90: #{multi_head_forward.1} parent=87 // pred_check_branch
          %2370 = sbr.rel (%p2368) target = $region92
        $region91: #{multi_head_forward.1} parent=87 // pred_region
          %s2371 = smul.u32 2, %s24
          %p2372 = scmp.lt.s32.totalorder %s2371, 11
          %s2373 = scalar_select %p2372, %s2371, 11
          %s2374 = smul.addr %s2373, 2
          %s2375 = scalar_lea.vmem %s8, %s2374
        $region92: #{multi_head_forward.1} parent=87 // pred_fallthru
          _
      $region88: #{multi_head_forward.1} parent=5 // pred_fallthru
        _
    $region6: #{multi_head_forward.1} parent=1 // loop_footer
      %s22 = sadd.s32 1, %s18
    $region7: #{multi_head_forward.1} parent=1 // loop_footer_branch
      %17 = sbr.rel target = $region3
    $region8: #{multi_head_forward.1} parent=1 // loop_exit
      _
    %2376 = vsyncpa [#allocation4], 1
    %s2377 = scalar_lea.sflag [#allocation4], 1
    %2378 = vsyncpa %s2377, 1
    %2379 = vsyncpa [#allocation6], 1
    %2380 = vsyncpa [#allocation9], 1

</llo_original>
